<compile_context>
chip_gen: v7x
topology: tpu7x:2x2x1
jax: 0.10.0
libtpu: 0.0.40
codegen_flags: <defaults>
</compile_context>

<pallas_src>
import functools

import jax
import jax.numpy as jnp
import numpy as np
from jax import lax
from jax.experimental import pallas as pl
from jax.experimental.pallas import tpu as pltpu

C_PAD = 128    # channel padding: 96 -> 128 lanes (lane-dense MXU/VPU/stores)
KSIZE = 3      # Conv1d kernel size


# ----------------------------------------------------------------------------
# Fused Pallas kernel
# ----------------------------------------------------------------------------
def _make_fused_kernel(extra_per_block, batch, seq_len, vocab, c_pad,
                       mm_dtype):
    """Builds the fused kernel body for a fixed (static) network shape.

    extra_per_block[i] = number of conv layers in block i AFTER the fused
    layer-0 (block i has i+1 layers total, so extra_per_block = (0, 1, 2, ...)).
    """
    nb = len(extra_per_block)
    n_extra = sum(extra_per_block)

    def kernel(*refs):
        tok_ref = refs[0]                               # [B, L, 1] int32
        w0_ref = refs[1]                                # [K*V, nb*c_pad]
        b0_ref = refs[2]                                # [1, nb*c_pad]
        ew_refs = refs[3:3 + n_extra]                   # each [K*c_pad, c_pad]
        eb_refs = refs[3 + n_extra:3 + 2 * n_extra]     # each [1, c_pad]
        lin_w_ref = refs[3 + 2 * n_extra]               # [nb*c_pad, c_pad]
        lin_b_ref = refs[4 + 2 * n_extra]               # [1, c_pad]
        out_ref = refs[5 + 2 * n_extra]                 # [B, c_pad]

        # ---- One-hot tokens (embedding itself is folded into w0) -----------
        tok = tok_ref[...]                              # [B, L, 1]
        onehot = (lax.broadcasted_iota(jnp.int32, (batch, seq_len, vocab), 2)
                  == tok).astype(mm_dtype)              # [B, L, V]

        # ---- Fused layer-0 of ALL blocks: one batched im2col matmul --------
        # Windows are built per sample (slice along the length axis), so they
        # never cross sample boundaries; then all samples stack into one LHS.
        l0 = seq_len - (KSIZE - 1)
        cols0 = jnp.concatenate(
            [onehot[:, k:k + l0, :] for k in range(KSIZE)],
            axis=-1).reshape(batch * l0, KSIZE * vocab)        # [B*L0, K*V]
        y0 = jnp.dot(cols0, w0_ref[...].astype(mm_dtype),
                     preferred_element_type=jnp.float32) + b0_ref[...]
        y0 = jnp.maximum(y0, 0.0).reshape(batch, l0, nb * c_pad)

        feats = []
        li = 0
        for bi, n_more in enumerate(extra_per_block):
            # Lane-aligned 128-wide slice of this block's layer-0 output.
            h = y0[:, :, bi * c_pad:(bi + 1) * c_pad]          # [B, L0, 128]
            for _ in range(n_more):
                lcur = h.shape[1]
                lout = lcur - (KSIZE - 1)
                cols = jnp.concatenate(
                    [h[:, k:k + lout, :] for k in range(KSIZE)],
                    axis=-1).reshape(batch * lout, KSIZE * c_pad)
                # Weights read at the use site (no hoisted live values).
                y = jnp.dot(cols.astype(mm_dtype),
                            ew_refs[li][...].astype(mm_dtype),
                            preferred_element_type=jnp.float32)
                y = y + eb_refs[li][...]                       # f32 epilogue
                h = jnp.maximum(y, 0.0).reshape(batch, lout, c_pad)
                li += 1
            # AdaptiveMaxPool1d(1): max over the length axis, fused in VMEM.
            feats.append(jnp.max(h, axis=1))                   # [B, 128]

        # ---- Concat + final linear: ONE matmul, ONE full-block store -------
        feat = jnp.concatenate(feats, axis=-1)                 # [B, nb*128]
        out = jnp.dot(feat.astype(mm_dtype),
                      lin_w_ref[...].astype(mm_dtype),
                      preferred_element_type=jnp.float32) + lin_b_ref[...]
        out_ref[...] = out.astype(out_ref.dtype)

    return kernel


# ----------------------------------------------------------------------------
# Host-side one-time packing + forward wrapper
# ----------------------------------------------------------------------------
def pack_params(params, out_channels=96, c_pad=C_PAD):
    """One-time host packing:
       * fold the embedding into every block's layer-0 conv weights,
       * concatenate all blocks' layer-0 weights along the output channels,
       * zero-pad channels 96 -> 128 and fold K into the Cin dim.
       The zero padding of biases and of the linear-weight rows keeps the
       padded channels exactly 0 through ReLU / max-pool."""
    emb = jnp.asarray(params["emb"], jnp.float32)          # [V, E], row0 = 0
    blocks = params["blocks"]
    nb = len(blocks)
    vocab = emb.shape[0]

    # Layer 0 of every block: fold embedding, stack along out-channels.
    w0_cols, b0_cols = [], []
    for layers in blocks:
        w0, b0 = layers[0]                                  # [K, E, 96], [96]
        w0_eff = jnp.einsum("ve,kec->kvc", emb, w0)         # [K, V, 96]
        w0p = (jnp.zeros((KSIZE, vocab, c_pad), jnp.float32)
               .at[:, :, :out_channels].set(w0_eff))
        w0_cols.append(w0p)
        b0_cols.append(jnp.zeros((c_pad,), jnp.float32)
                       .at[:out_channels].set(b0))
    w0_all = jnp.concatenate(w0_cols, axis=-1).reshape(KSIZE * vocab,
                                                       nb * c_pad)
    b0_all = jnp.concatenate(b0_cols, axis=-1).reshape(1, nb * c_pad)

    # Deeper layers (block i has i extra layers), padded 96 -> 128.
    extra_w, extra_b, extra_per_block = [], [], []
    for layers in blocks:
        extra_per_block.append(len(layers) - 1)
        for (w, b) in layers[1:]:                           # [K, 96, 96]
            wp = (jnp.zeros((KSIZE, c_pad, c_pad), jnp.float32)
                  .at[:, :out_channels, :out_channels].set(w))
            extra_w.append(wp.reshape(KSIZE * c_pad, c_pad))
            extra_b.append(jnp.zeros((1, c_pad), jnp.float32)
                           .at[0, :out_channels].set(b))

    lin_w, lin_b = params["lin_w"], params["lin_b"]
    lin_w_pad = jnp.zeros((nb * c_pad, c_pad), jnp.float32)
    for i in range(nb):
        lin_w_pad = lin_w_pad.at[
            i * c_pad:i * c_pad + out_channels, :out_channels
        ].set(lin_w[i * out_channels:(i + 1) * out_channels, :])
    lin_b_pad = (jnp.zeros((1, c_pad), jnp.float32)
                 .at[0, :out_channels].set(lin_b))

    packed = dict(w0=w0_all, b0=b0_all, extra_w=extra_w, extra_b=extra_b,
                  lin_w=lin_w_pad, lin_b=lin_b_pad)
    return packed, tuple(extra_per_block)


@functools.partial(jax.jit,
                   static_argnames=("extra_per_block", "out_channels",
                                    "use_bf16"))
def sirna_encoder2_forward(packed, tokens, *, extra_per_block,
                           out_channels=96, use_bf16=False):
    """tokens: int32 [B, L] -> [B, out_channels]."""
    B, L = tokens.shape
    c_pad = packed["lin_b"].shape[1]
    vocab = packed["w0"].shape[0] // KSIZE
    mm_dtype = jnp.bfloat16 if use_bf16 else jnp.float32

    tok3 = tokens.reshape(B, L, 1).astype(jnp.int32)
    kernel = _make_fused_kernel(extra_per_block, B, L, vocab, c_pad, mm_dtype)

    out_pad = pl.pallas_call(
        kernel,
        out_shape=jax.ShapeDtypeStruct((B, c_pad), jnp.float32),
        compiler_params=pltpu.CompilerParams(
            # Safe on v5e/v6e (128 MiB) and v7x (64 MiB physical VMEM).
            vmem_limit_bytes=16 * 1024 * 1024),
    )(tok3, packed["w0"], packed["b0"],
      *packed["extra_w"], *packed["extra_b"],
      packed["lin_w"], packed["lin_b"])
    return out_pad[:, :out_channels]


# ----------------------------------------------------------------------------
# Parameter construction (deterministic, synthetic)
# ----------------------------------------------------------------------------
def init_params(key, block_num, vocab_size, embedding_dim, out_channels=96):
    keys = jax.random.split(key, 3 + 4 * block_num * block_num)
    kit = iter(keys)

    # Embedding table, padding_idx=0 -> row 0 is zeros.
    emb = 0.02 * jax.random.normal(next(kit), (vocab_size, embedding_dim),
                                   jnp.float32)
    emb = emb.at[0].set(0.0)

    blocks = []
    for block_idx in range(block_num):
        layers = []
        cin = embedding_dim
        for _ in range(block_idx + 1):
            w = 0.05 * jax.random.normal(next(kit), (3, cin, out_channels),
                                         jnp.float32)   # [K, Cin, Cout]
            b = 0.05 * jax.random.normal(next(kit), (out_channels,),
                                         jnp.float32)
            layers.append((w, b))
            cin = out_channels
        blocks.append(layers)

    feat = block_num * out_channels
    lin_w = 0.05 * jax.random.normal(next(kit), (feat, out_channels),
                                     jnp.float32)        # [F, 96]
    lin_b = 0.05 * jax.random.normal(next(kit), (out_channels,), jnp.float32)
    return dict(emb=emb, blocks=blocks, lin_w=lin_w, lin_b=lin_b)


# Pure-JAX reference for the correctness check.
def _reference_forward(params, tokens):
    x = jnp.take(params["emb"], tokens, axis=0)          # [B, L, E]
    feats = []
    for layers in params["blocks"]:
        h = x
        for (w, b) in layers:
            h = lax.conv_general_dilated(
                h, w, window_strides=(1,), padding="VALID",
                dimension_numbers=("NWC", "WIO", "NWC"))
            h = jnp.maximum(h + b[None, None, :], 0.0)
        feats.append(jnp.max(h, axis=1))
    cat = jnp.concatenate(feats, axis=-1)
    return cat @ params["lin_w"] + params["lin_b"]


# ----------------------------------------------------------------------------
if __name__ == "__main__":
    BLOCK_NUM = 3
    VOCAB_SIZE = 8
    EMBEDDING_DIM = 32
    BATCH = 2
    SEQ_LEN = 16

    key = jax.random.PRNGKey(0)
    kp, kx = jax.random.split(key)
    params = init_params(kp, BLOCK_NUM, VOCAB_SIZE, EMBEDDING_DIM)
    tokens = jax.random.randint(kx, (BATCH, SEQ_LEN), 0, VOCAB_SIZE,
                                dtype=jnp.int32)

    packed, extra_per_block = pack_params(params)
    out = sirna_encoder2_forward(packed, tokens,
                                 extra_per_block=extra_per_block,
                                 use_bf16=False)   # bf16 path for prod v6e/v5e
    out = jax.block_until_ready(out)

    ref = jax.block_until_ready(_reference_forward(params, tokens))
    np.testing.assert_allclose(np.asarray(out), np.asarray(ref),
                               rtol=1e-4, atol=1e-4)
    assert out.shape == (BATCH, 96)

    print("KERNEL_OK")
</pallas_src>

<mosaic_0001>
module attributes {stable_mosaic.version = 11 : i64} {
  func.func @kernel(%arg0: memref<2x16x1xi32, #tpu.memory_space<vmem>>, %arg1: memref<24x384xf32, #tpu.memory_space<vmem>>, %arg2: memref<1x384xf32, #tpu.memory_space<vmem>>, %arg3: memref<384x128xf32, #tpu.memory_space<vmem>>, %arg4: memref<384x128xf32, #tpu.memory_space<vmem>>, %arg5: memref<384x128xf32, #tpu.memory_space<vmem>>, %arg6: memref<1x128xf32, #tpu.memory_space<vmem>>, %arg7: memref<1x128xf32, #tpu.memory_space<vmem>>, %arg8: memref<1x128xf32, #tpu.memory_space<vmem>>, %arg9: memref<384x128xf32, #tpu.memory_space<vmem>>, %arg10: memref<1x128xf32, #tpu.memory_space<vmem>>, %arg11: memref<2x128xf32, #tpu.memory_space<vmem>>) attributes {dimension_semantics = [], scalar_prefetch = 0 : i64, scratch_operands = 0 : i64, tpu.core_type = #tpu.core_type<tc>} {
    %c0 = arith.constant 0 : index
    %c0_0 = arith.constant 0 : index
    %c0_1 = arith.constant 0 : index
    %0 = vector.load %arg0[%c0, %c0_0, %c0_1] : memref<2x16x1xi32, #tpu.memory_space<vmem>>, vector<2x16x1xi32>
    %1 = tpu.iota {dimensions = array<i32: 2>} : vector<2x16x8xi32>
    %2 = vector.broadcast %0 : vector<2x16x1xi32> to vector<2x16x8xi32>
    %3 = arith.cmpi eq, %1, %2 : vector<2x16x8xi32>
    %4 = arith.extui %3 : vector<2x16x8xi1> to vector<2x16x8xi32>
    %5 = arith.sitofp %4 : vector<2x16x8xi32> to vector<2x16x8xf32>
    %6 = vector.extract_strided_slice %5 {offsets = [0, 0, 0], sizes = [2, 14, 8], strides = [1, 1, 1]} : vector<2x16x8xf32> to vector<2x14x8xf32>
    %7 = vector.extract_strided_slice %5 {offsets = [0, 1, 0], sizes = [2, 14, 8], strides = [1, 1, 1]} : vector<2x16x8xf32> to vector<2x14x8xf32>
    %8 = vector.extract_strided_slice %5 {offsets = [0, 2, 0], sizes = [2, 14, 8], strides = [1, 1, 1]} : vector<2x16x8xf32> to vector<2x14x8xf32>
    %9 = tpu.concatenate %6, %7, %8 in 2 : vector<2x14x8xf32>, vector<2x14x8xf32>, vector<2x14x8xf32> -> vector<2x14x24xf32>
    %10 = vector.shape_cast %9 : vector<2x14x24xf32> to vector<28x24xf32>
    %c0_2 = arith.constant 0 : index
    %c0_3 = arith.constant 0 : index
    %11 = vector.load %arg1[%c0_2, %c0_3] : memref<24x384xf32, #tpu.memory_space<vmem>>, vector<24x384xf32>
    %cst = arith.constant dense<0.000000e+00> : vector<28x384xf32>
    %12 = tpu.matmul %10, %11, %cst {dimension_numbers = #tpu.dot_dimension_numbers<[1], [0], [0], [1], [0, 0, 1, 1], [], []>} : vector<28x24xf32>, vector<24x384xf32>, vector<28x384xf32> -> vector<28x384xf32>
    %c0_4 = arith.constant 0 : index
    %c0_5 = arith.constant 0 : index
    %13 = vector.load %arg2[%c0_4, %c0_5] : memref<1x384xf32, #tpu.memory_space<vmem>>, vector<1x384xf32>
    %14 = vector.broadcast %13 : vector<1x384xf32> to vector<28x384xf32>
    %15 = arith.addf %12, %14 : vector<28x384xf32>
    %cst_6 = arith.constant 0.000000e+00 : f32
    %16 = vector.broadcast %cst_6 : f32 to vector<28x384xf32>
    %17 = arith.maximumf %15, %16 : vector<28x384xf32>
    %18 = vector.shape_cast %17 : vector<28x384xf32> to vector<2x14x384xf32>
    %19 = vector.extract_strided_slice %18 {offsets = [0, 0, 0], sizes = [2, 14, 128], strides = [1, 1, 1]} : vector<2x14x384xf32> to vector<2x14x128xf32>
    %cst_7 = arith.constant dense<0xFF800000> : vector<2x128xf32>
    %20 = vector.multi_reduction <maximumf>, %19, %cst_7 [1] : vector<2x14x128xf32> to vector<2x128xf32>
    %21 = vector.extract_strided_slice %18 {offsets = [0, 0, 128], sizes = [2, 14, 128], strides = [1, 1, 1]} : vector<2x14x384xf32> to vector<2x14x128xf32>
    %22 = vector.extract_strided_slice %21 {offsets = [0, 0, 0], sizes = [2, 12, 128], strides = [1, 1, 1]} : vector<2x14x128xf32> to vector<2x12x128xf32>
    %23 = vector.extract_strided_slice %21 {offsets = [0, 1, 0], sizes = [2, 12, 128], strides = [1, 1, 1]} : vector<2x14x128xf32> to vector<2x12x128xf32>
    %24 = vector.extract_strided_slice %21 {offsets = [0, 2, 0], sizes = [2, 12, 128], strides = [1, 1, 1]} : vector<2x14x128xf32> to vector<2x12x128xf32>
    %25 = tpu.concatenate %22, %23, %24 in 2 : vector<2x12x128xf32>, vector<2x12x128xf32>, vector<2x12x128xf32> -> vector<2x12x384xf32>
    %26 = vector.shape_cast %25 : vector<2x12x384xf32> to vector<24x384xf32>
    %c0_8 = arith.constant 0 : index
    %c0_9 = arith.constant 0 : index
    %27 = vector.load %arg3[%c0_8, %c0_9] : memref<384x128xf32, #tpu.memory_space<vmem>>, vector<384x128xf32>
    %cst_10 = arith.constant dense<0.000000e+00> : vector<24x128xf32>
    %28 = tpu.matmul %26, %27, %cst_10 {dimension_numbers = #tpu.dot_dimension_numbers<[1], [0], [0], [1], [0, 0, 1, 1], [], []>} : vector<24x384xf32>, vector<384x128xf32>, vector<24x128xf32> -> vector<24x128xf32>
    %c0_11 = arith.constant 0 : index
    %c0_12 = arith.constant 0 : index
    %29 = vector.load %arg6[%c0_11, %c0_12] : memref<1x128xf32, #tpu.memory_space<vmem>>, vector<1x128xf32>
    %30 = vector.broadcast %29 : vector<1x128xf32> to vector<24x128xf32>
    %31 = arith.addf %28, %30 : vector<24x128xf32>
    %cst_13 = arith.constant 0.000000e+00 : f32
    %32 = vector.broadcast %cst_13 : f32 to vector<24x128xf32>
    %33 = arith.maximumf %31, %32 : vector<24x128xf32>
    %34 = vector.shape_cast %33 : vector<24x128xf32> to vector<2x12x128xf32>
    %cst_14 = arith.constant dense<0xFF800000> : vector<2x128xf32>
    %35 = vector.multi_reduction <maximumf>, %34, %cst_14 [1] : vector<2x12x128xf32> to vector<2x128xf32>
    %36 = vector.extract_strided_slice %18 {offsets = [0, 0, 256], sizes = [2, 14, 128], strides = [1, 1, 1]} : vector<2x14x384xf32> to vector<2x14x128xf32>
    %37 = vector.extract_strided_slice %36 {offsets = [0, 0, 0], sizes = [2, 12, 128], strides = [1, 1, 1]} : vector<2x14x128xf32> to vector<2x12x128xf32>
    %38 = vector.extract_strided_slice %36 {offsets = [0, 1, 0], sizes = [2, 12, 128], strides = [1, 1, 1]} : vector<2x14x128xf32> to vector<2x12x128xf32>
    %39 = vector.extract_strided_slice %36 {offsets = [0, 2, 0], sizes = [2, 12, 128], strides = [1, 1, 1]} : vector<2x14x128xf32> to vector<2x12x128xf32>
    %40 = tpu.concatenate %37, %38, %39 in 2 : vector<2x12x128xf32>, vector<2x12x128xf32>, vector<2x12x128xf32> -> vector<2x12x384xf32>
    %41 = vector.shape_cast %40 : vector<2x12x384xf32> to vector<24x384xf32>
    %c0_15 = arith.constant 0 : index
    %c0_16 = arith.constant 0 : index
    %42 = vector.load %arg4[%c0_15, %c0_16] : memref<384x128xf32, #tpu.memory_space<vmem>>, vector<384x128xf32>
    %cst_17 = arith.constant dense<0.000000e+00> : vector<24x128xf32>
    %43 = tpu.matmul %41, %42, %cst_17 {dimension_numbers = #tpu.dot_dimension_numbers<[1], [0], [0], [1], [0, 0, 1, 1], [], []>} : vector<24x384xf32>, vector<384x128xf32>, vector<24x128xf32> -> vector<24x128xf32>
    %c0_18 = arith.constant 0 : index
    %c0_19 = arith.constant 0 : index
    %44 = vector.load %arg7[%c0_18, %c0_19] : memref<1x128xf32, #tpu.memory_space<vmem>>, vector<1x128xf32>
    %45 = vector.broadcast %44 : vector<1x128xf32> to vector<24x128xf32>
    %46 = arith.addf %43, %45 : vector<24x128xf32>
    %cst_20 = arith.constant 0.000000e+00 : f32
    %47 = vector.broadcast %cst_20 : f32 to vector<24x128xf32>
    %48 = arith.maximumf %46, %47 : vector<24x128xf32>
    %49 = vector.shape_cast %48 : vector<24x128xf32> to vector<2x12x128xf32>
    %50 = vector.extract_strided_slice %49 {offsets = [0, 0, 0], sizes = [2, 10, 128], strides = [1, 1, 1]} : vector<2x12x128xf32> to vector<2x10x128xf32>
    %51 = vector.extract_strided_slice %49 {offsets = [0, 1, 0], sizes = [2, 10, 128], strides = [1, 1, 1]} : vector<2x12x128xf32> to vector<2x10x128xf32>
    %52 = vector.extract_strided_slice %49 {offsets = [0, 2, 0], sizes = [2, 10, 128], strides = [1, 1, 1]} : vector<2x12x128xf32> to vector<2x10x128xf32>
    %53 = tpu.concatenate %50, %51, %52 in 2 : vector<2x10x128xf32>, vector<2x10x128xf32>, vector<2x10x128xf32> -> vector<2x10x384xf32>
    %54 = vector.shape_cast %53 : vector<2x10x384xf32> to vector<20x384xf32>
    %c0_21 = arith.constant 0 : index
    %c0_22 = arith.constant 0 : index
    %55 = vector.load %arg5[%c0_21, %c0_22] : memref<384x128xf32, #tpu.memory_space<vmem>>, vector<384x128xf32>
    %cst_23 = arith.constant dense<0.000000e+00> : vector<20x128xf32>
    %56 = tpu.matmul %54, %55, %cst_23 {dimension_numbers = #tpu.dot_dimension_numbers<[1], [0], [0], [1], [0, 0, 1, 1], [], []>} : vector<20x384xf32>, vector<384x128xf32>, vector<20x128xf32> -> vector<20x128xf32>
    %c0_24 = arith.constant 0 : index
    %c0_25 = arith.constant 0 : index
    %57 = vector.load %arg8[%c0_24, %c0_25] : memref<1x128xf32, #tpu.memory_space<vmem>>, vector<1x128xf32>
    %58 = vector.broadcast %57 : vector<1x128xf32> to vector<20x128xf32>
    %59 = arith.addf %56, %58 : vector<20x128xf32>
    %cst_26 = arith.constant 0.000000e+00 : f32
    %60 = vector.broadcast %cst_26 : f32 to vector<20x128xf32>
    %61 = arith.maximumf %59, %60 : vector<20x128xf32>
    %62 = vector.shape_cast %61 : vector<20x128xf32> to vector<2x10x128xf32>
    %cst_27 = arith.constant dense<0xFF800000> : vector<2x128xf32>
    %63 = vector.multi_reduction <maximumf>, %62, %cst_27 [1] : vector<2x10x128xf32> to vector<2x128xf32>
    %64 = tpu.concatenate %20, %35, %63 in 1 : vector<2x128xf32>, vector<2x128xf32>, vector<2x128xf32> -> vector<2x384xf32>
    %c0_28 = arith.constant 0 : index
    %c0_29 = arith.constant 0 : index
    %65 = vector.load %arg9[%c0_28, %c0_29] : memref<384x128xf32, #tpu.memory_space<vmem>>, vector<384x128xf32>
    %cst_30 = arith.constant dense<0.000000e+00> : vector<2x128xf32>
    %66 = tpu.matmul %64, %65, %cst_30 {dimension_numbers = #tpu.dot_dimension_numbers<[1], [0], [0], [1], [0, 0, 1, 1], [], []>} : vector<2x384xf32>, vector<384x128xf32>, vector<2x128xf32> -> vector<2x128xf32>
    %c0_31 = arith.constant 0 : index
    %c0_32 = arith.constant 0 : index
    %67 = vector.load %arg10[%c0_31, %c0_32] : memref<1x128xf32, #tpu.memory_space<vmem>>, vector<1x128xf32>
    %68 = vector.broadcast %67 : vector<1x128xf32> to vector<2x128xf32>
    %69 = arith.addf %66, %68 : vector<2x128xf32>
    %c0_33 = arith.constant 0 : index
    %c0_34 = arith.constant 0 : index
    %70 = vector.load %arg11[%c0_33, %c0_34] : memref<2x128xf32, #tpu.memory_space<vmem>>, vector<2x128xf32>
    tpu.vector_store %arg11[%c0_33, %c0_34], %69 {strides = array<i32>} : memref<2x128xf32, #tpu.memory_space<vmem>>, vector<2x128xf32>,
    return
  }
}

</mosaic_0001>

<llo_original>
// kernel: sirna_encoder2_forward.1
$region0: #{sirna_encoder2_forward.1}
  #allocation0 [shape = 'u32[]', space=smem, size = 0x4, offset = 0x4, fixed_abs, tag = 'smem constant byte address 0x4 - core index']
  #allocation1 [shape = 'u32[144,128]{1,0:T(1,128)}', space=vmem, size = 0x12000, scoped, tag = 'internal scratch']
  %s0 = inlined_call_operand.vmem [shape: s32[2,16,1], index: 0, kind: input, shape index: {}]
  %s1 = inlined_call_operand.hbm [shape: f32[24,384], index: 1, kind: input, shape index: {}]
  %s2 = inlined_call_operand.vmem [shape: f32[1,384], index: 2, kind: input, shape index: {}]
  %s3 = inlined_call_operand.hbm [shape: f32[384,128], index: 3, kind: input, shape index: {}]
  %s4 = inlined_call_operand.hbm [shape: f32[384,128], index: 4, kind: input, shape index: {}]
  %s5 = inlined_call_operand.hbm [shape: f32[384,128], index: 5, kind: input, shape index: {}]
  %s6 = inlined_call_operand.vmem [shape: f32[1,128], index: 6, kind: input, shape index: {}]
  %s7 = inlined_call_operand.vmem [shape: f32[1,128], index: 7, kind: input, shape index: {}]
  %s8 = inlined_call_operand.vmem [shape: f32[1,128], index: 8, kind: input, shape index: {}]
  %s9 = inlined_call_operand.hbm [shape: f32[384,128], index: 9, kind: input, shape index: {}]
  %s10 = inlined_call_operand.vmem [shape: f32[1,128], index: 10, kind: input, shape index: {}]
  %s11 = inlined_call_operand.hbm [shape: f32[2,128], index: 11, kind: output, shape index: {}]
  %s12 = sld [smem:[#allocation0]]
  $region74: #{sirna_encoder2_forward.1} parent=0
    _
  %s14 = ssub.s32 1, %s12
  %s15 = scalar_select 0, %s14, %s12
  $region1: #{sirna_encoder2_forward.1} parent=0
    #allocation2 [shape = 'u8[36864]{0}', space=vmem, size = 0x9000, scoped, tag = 'input window, operand 1, single buffered']
    #allocation3 [shape = 's32[1]{0}', space=sflag, size = 0x4, scoped, tag = 'scoped memory for sirna_encoder2_forward.1']
    #allocation4 [shape = 's32[1]{0}', space=sflag, size = 0x4, scoped, tag = 'scoped memory for sirna_encoder2_forward.1']
    #allocation5 [shape = 'u8[196608]{0}', space=vmem, size = 0x30000, scoped, tag = 'input window, operand 3, single buffered']
    #allocation6 [shape = 's32[1]{0}', space=sflag, size = 0x4, scoped, tag = 'scoped memory for sirna_encoder2_forward.1']
    #allocation7 [shape = 'u8[196608]{0}', space=vmem, size = 0x30000, scoped, tag = 'input window, operand 4, single buffered']
    #allocation8 [shape = 'u8[196608]{0}', space=vmem, size = 0x30000, scoped, tag = 'input window, operand 5, single buffered']
    #allocation9 [shape = 's32[1]{0}', space=sflag, size = 0x4, scoped, tag = 'scoped memory for sirna_encoder2_forward.1']
    #allocation10 [shape = 'u8[196608]{0}', space=vmem, size = 0x30000, scoped, tag = 'input window, operand 9, single buffered']
    #allocation11 [shape = 'u8[1024]{0}', space=vmem, size = 0x400, scoped, tag = 'output window, operand 0, single buffered']
    %16 = vsyncpa [#allocation3], 0
    %17 = vsyncpa [#allocation6], 0
    %18 = vsyncpa [#allocation9], 0
    %19 = vsyncpa [#allocation4], 0
    // Predicated region
    $region2: #{sirna_encoder2_forward.1} parent=1 // pred_check
      _
    $region3: #{sirna_encoder2_forward.1} parent=1 // pred_check_branch
      %21 = sbr.rel (0) target = $region5
    $region4: #{sirna_encoder2_forward.1} parent=1 // pred_region
      _
    $region5: #{sirna_encoder2_forward.1} parent=1 // pred_fallthru
      _
    // Predicated region
    $region6: #{sirna_encoder2_forward.1} parent=1 // pred_check
      _
    $region7: #{sirna_encoder2_forward.1} parent=1 // pred_check_branch
      %23 = sbr.rel (0) target = $region9
    $region8: #{sirna_encoder2_forward.1} parent=1 // pred_region
      %s25 = ssub.s32 1152, 1152
      %26 = vsyncadd [#allocation3], %s25
      %s27 = sshll.u32 [#allocation2], 4
      %s28 = int_to_ptr.vmem [resolvable:$true] %s27
      %33 = dma.hbm_to_vmem [thread:$0]  %s1, 1152, %s28, [#allocation3], 384, 384, 24
    $region9: #{sirna_encoder2_forward.1} parent=1 // pred_fallthru
      _
    // Predicated region
    $region10: #{sirna_encoder2_forward.1} parent=1 // pred_check
      _
    $region11: #{sirna_encoder2_forward.1} parent=1 // pred_check_branch
      %35 = sbr.rel (0) target = $region13
    $region12: #{sirna_encoder2_forward.1} parent=1 // pred_region
      _
    $region13: #{sirna_encoder2_forward.1} parent=1 // pred_fallthru
      _
    // Predicated region
    $region14: #{sirna_encoder2_forward.1} parent=1 // pred_check
      _
    $region15: #{sirna_encoder2_forward.1} parent=1 // pred_check_branch
      %37 = sbr.rel (0) target = $region17
    $region16: #{sirna_encoder2_forward.1} parent=1 // pred_region
      %s39 = ssub.s32 6144, 6144
      %40 = vsyncadd [#allocation6], %s39
      %s41 = sshll.u32 [#allocation5], 4
      %s42 = int_to_ptr.vmem [resolvable:$true] %s41
      %47 = dma.hbm_to_vmem [thread:$0]  %s3, 6144, %s42, [#allocation6], 128, 128, 8
    $region17: #{sirna_encoder2_forward.1} parent=1 // pred_fallthru
      _
    // Predicated region
    $region18: #{sirna_encoder2_forward.1} parent=1 // pred_check
      _
    $region19: #{sirna_encoder2_forward.1} parent=1 // pred_check_branch
      %49 = sbr.rel (0) target = $region21
    $region20: #{sirna_encoder2_forward.1} parent=1 // pred_region
      %s51 = ssub.s32 6144, 6144
      %52 = vsyncadd [#allocation6], %s51
      %s53 = sshll.u32 [#allocation7], 4
      %s54 = int_to_ptr.vmem [resolvable:$true] %s53
      %59 = dma.hbm_to_vmem [thread:$0]  %s4, 6144, %s54, [#allocation6], 128, 128, 8
    $region21: #{sirna_encoder2_forward.1} parent=1 // pred_fallthru
      _
    // Predicated region
    $region22: #{sirna_encoder2_forward.1} parent=1 // pred_check
      _
    $region23: #{sirna_encoder2_forward.1} parent=1 // pred_check_branch
      %61 = sbr.rel (0) target = $region25
    $region24: #{sirna_encoder2_forward.1} parent=1 // pred_region
      %s63 = ssub.s32 6144, 6144
      %64 = vsyncadd [#allocation9], %s63
      %s65 = sshll.u32 [#allocation8], 4
      %s66 = int_to_ptr.vmem [resolvable:$true] %s65
      %71 = dma.hbm_to_vmem [thread:$0]  %s5, 6144, %s66, [#allocation9], 128, 128, 8
    $region25: #{sirna_encoder2_forward.1} parent=1 // pred_fallthru
      _
    // Predicated region
    $region26: #{sirna_encoder2_forward.1} parent=1 // pred_check
      _
    $region27: #{sirna_encoder2_forward.1} parent=1 // pred_check_branch
      %73 = sbr.rel (0) target = $region29
    $region28: #{sirna_encoder2_forward.1} parent=1 // pred_region
      _
    $region29: #{sirna_encoder2_forward.1} parent=1 // pred_fallthru
      _
    // Predicated region
    $region30: #{sirna_encoder2_forward.1} parent=1 // pred_check
      _
    $region31: #{sirna_encoder2_forward.1} parent=1 // pred_check_branch
      %75 = sbr.rel (0) target = $region33
    $region32: #{sirna_encoder2_forward.1} parent=1 // pred_region
      _
    $region33: #{sirna_encoder2_forward.1} parent=1 // pred_fallthru
      _
    // Predicated region
    $region34: #{sirna_encoder2_forward.1} parent=1 // pred_check
      _
    $region35: #{sirna_encoder2_forward.1} parent=1 // pred_check_branch
      %77 = sbr.rel (0) target = $region37
    $region36: #{sirna_encoder2_forward.1} parent=1 // pred_region
      _
    $region37: #{sirna_encoder2_forward.1} parent=1 // pred_fallthru
      _
    // Predicated region
    $region38: #{sirna_encoder2_forward.1} parent=1 // pred_check
      _
    $region39: #{sirna_encoder2_forward.1} parent=1 // pred_check_branch
      %79 = sbr.rel (0) target = $region41
    $region40: #{sirna_encoder2_forward.1} parent=1 // pred_region
      %s81 = ssub.s32 6144, 6144
      %82 = vsyncadd [#allocation9], %s81
      %s83 = sshll.u32 [#allocation10], 4
      %s84 = int_to_ptr.vmem [resolvable:$true] %s83
      %89 = dma.hbm_to_vmem [thread:$0]  %s9, 6144, %s84, [#allocation9], 128, 128, 8
    $region41: #{sirna_encoder2_forward.1} parent=1 // pred_fallthru
      _
    // Predicated region
    $region42: #{sirna_encoder2_forward.1} parent=1 // pred_check
      _
    $region43: #{sirna_encoder2_forward.1} parent=1 // pred_check_branch
      %91 = sbr.rel (0) target = $region45
    $region44: #{sirna_encoder2_forward.1} parent=1 // pred_region
      _
    $region45: #{sirna_encoder2_forward.1} parent=1 // pred_fallthru
      _
    // Predicated region
    $region46: #{sirna_encoder2_forward.1} parent=1 // pred_check
      _
    $region47: #{sirna_encoder2_forward.1} parent=1 // pred_check_branch
      %93 = sbr.rel (0) target = $region49
    $region48: #{sirna_encoder2_forward.1} parent=1 // pred_region
      %94 = dma.done [#allocation3], 1152
    $region49: #{sirna_encoder2_forward.1} parent=1 // pred_fallthru
      _
    // Predicated region
    $region50: #{sirna_encoder2_forward.1} parent=1 // pred_check
      _
    $region51: #{sirna_encoder2_forward.1} parent=1 // pred_check_branch
      %96 = sbr.rel (0) target = $region53
    $region52: #{sirna_encoder2_forward.1} parent=1 // pred_region
      %97 = dma.done [#allocation6], 6144
    $region53: #{sirna_encoder2_forward.1} parent=1 // pred_fallthru
      _
    // Predicated region
    $region54: #{sirna_encoder2_forward.1} parent=1 // pred_check
      _
    $region55: #{sirna_encoder2_forward.1} parent=1 // pred_check_branch
      %99 = sbr.rel (0) target = $region57
    $region56: #{sirna_encoder2_forward.1} parent=1 // pred_region
      %100 = dma.done [#allocation6], 6144
    $region57: #{sirna_encoder2_forward.1} parent=1 // pred_fallthru
      _
    // Predicated region
    $region58: #{sirna_encoder2_forward.1} parent=1 // pred_check
      _
    $region59: #{sirna_encoder2_forward.1} parent=1 // pred_check_branch
      %102 = sbr.rel (0) target = $region61
    $region60: #{sirna_encoder2_forward.1} parent=1 // pred_region
      %103 = dma.done [#allocation9], 6144
    $region61: #{sirna_encoder2_forward.1} parent=1 // pred_fallthru
      _
    // Predicated region
    $region62: #{sirna_encoder2_forward.1} parent=1 // pred_check
      _
    $region63: #{sirna_encoder2_forward.1} parent=1 // pred_check_branch
      %105 = sbr.rel (0) target = $region65
    $region64: #{sirna_encoder2_forward.1} parent=1 // pred_region
      %106 = dma.done [#allocation9], 6144
    $region65: #{sirna_encoder2_forward.1} parent=1 // pred_fallthru
      _
    %v107 = vld [vmem:[%s0] sm:$0xff]
    %v108 = vld [vmem:[%s0 + $0x8] sm:$0xff]
    %v109 = vld [vmem:[%s0 + $0x10] sm:$0xff]
    %v110 = vld [vmem:[%s0 + $0x18] sm:$0xff]
    %v111 = vlaneseq
    %v112 = vand.u32 %v111, 127
    %113 = vset.pattern.permute.xlu0 0
    %114 = vperm.xlu0 %113, %v107
    %v115 = vpop.permute.xlu0 %114
    %116 = vset.pattern.permute.xlu0 0
    %117 = vperm.xlu0 %116, %v108
    %v118 = vpop.permute.xlu0 %117
    %119 = vset.pattern.permute.xlu0 0
    %120 = vperm.xlu0 %119, %v109
    %v121 = vpop.permute.xlu0 %120
    %122 = vset.pattern.permute.xlu0 0
    %123 = vperm.xlu0 %122, %v110
    %v124 = vpop.permute.xlu0 %123
    %vm125 = vcmp.eq.s32.totalorder %v112, %v115
    %vm126 = vcmp.eq.s32.totalorder %v112, %v118
    %vm127 = vcmp.eq.s32.totalorder %v112, %v121
    %vm128 = vcmp.eq.s32.totalorder %v112, %v124
    %v129 = vsel %vm125, 1, 0
    %v130 = vsel %vm126, 1, 0
    %v131 = vsel %vm127, 1, 0
    %v132 = vsel %vm128, 1, 0
    %v133 = vcvt.s32.f32 %v129
    %v134 = vcvt.s32.f32 %v130
    %v135 = vcvt.s32.f32 %v131
    %v136 = vcvt.s32.f32 %v132
    %vm141 = vcmask 1046528
    %v142 = vrot.slane %v133, 1
    %v143 = vrot.slane %v134, 1
    %v144 = vsel %vm141, %v142, %v143
    %v145 = vrot.slane %v135, 1
    %v146 = vrot.slane %v136, 1
    %v147 = vsel %vm141, %v145, %v146
    %148 = vrot.lane.b32.xlu0 %v144, 8
    %v149 = vpop.permute.xlu0 %148
    %150 = vrot.lane.b32.xlu0 %v143, 8
    %v151 = vpop.permute.xlu0 %150
    %152 = vrot.lane.b32.xlu0 %v147, 8
    %v153 = vpop.permute.xlu0 %152
    %154 = vrot.lane.b32.xlu0 %v146, 8
    %v155 = vpop.permute.xlu0 %154
    %vm160 = vcmask 1045504
    %v161 = vrot.slane %v133, 2
    %v162 = vrot.slane %v134, 2
    %v163 = vsel %vm160, %v161, %v162
    %v164 = vrot.slane %v135, 2
    %v165 = vrot.slane %v136, 2
    %v166 = vsel %vm160, %v164, %v165
    %167 = vrot.lane.b32.xlu0 %v163, 16
    %v168 = vpop.permute.xlu0 %167
    %169 = vrot.lane.b32.xlu0 %v162, 16
    %v170 = vpop.permute.xlu0 %169
    %171 = vrot.lane.b32.xlu0 %v166, 16
    %v172 = vpop.permute.xlu0 %171
    %173 = vrot.lane.b32.xlu0 %v165, 16
    %v174 = vpop.permute.xlu0 %173
    %vm179 = vcmask 64512
    %v180 = vsel %vm179, %v133, %v149
    %v181 = vsel %vm179, %v134, %v151
    %v182 = vsel %vm179, %v135, %v153
    %v183 = vsel %vm179, %v136, %v155
    %vm184 = vcmask 130048
    %v185 = vsel %vm184, %v180, %v168
    %v186 = vsel %vm184, %v181, %v170
    %v187 = vsel %vm184, %v182, %v172
    %v188 = vsel %vm184, %v183, %v174
    %v193 = vcombine.high %v185, %v185
    %v195 = vunpack.c.l.s4 1983009808
    %v196 = vunpack.c.0.s8 %v195
    %v197 = vlaneseq
    %v198 = vshrl.u32 %v197, 7
    %v199 = vsub.s32 %v196, %v198
    %v200 = vrot.slane %v185, %v199
    %v202 = vunpack.c.l.s4 1983009808
    %v203 = vunpack.c.0.s8 %v202
    %v204 = vlaneseq
    %v205 = vshrl.u32 %v204, 7
    %v206 = vsub.s32 %v203, %v205
    %v207 = vrot.slane %v193, %v206
    %v208 = vcombine.high %v200, %v200
    %v209 = vcombine.high %v207, %v207
    %v210 = vcombine.high %v186, %v186
    %v212 = vunpack.c.l.s4 1983009808
    %v213 = vunpack.c.0.s8 %v212
    %v214 = vlaneseq
    %v215 = vshrl.u32 %v214, 7
    %v216 = vsub.s32 %v213, %v215
    %v217 = vrot.slane %v186, %v216
    %v219 = vunpack.c.l.s4 1983009808
    %v220 = vunpack.c.0.s8 %v219
    %v221 = vlaneseq
    %v222 = vshrl.u32 %v221, 7
    %v223 = vsub.s32 %v220, %v222
    %v224 = vrot.slane %v210, %v223
    %v225 = vcombine.high %v217, %v217
    %v226 = vcombine.high %v187, %v187
    %v228 = vunpack.c.l.s4 1983009808
    %v229 = vunpack.c.0.s8 %v228
    %v230 = vlaneseq
    %v231 = vshrl.u32 %v230, 7
    %v232 = vsub.s32 %v229, %v231
    %v233 = vrot.slane %v187, %v232
    %v235 = vunpack.c.l.s4 1983009808
    %v236 = vunpack.c.0.s8 %v235
    %v237 = vlaneseq
    %v238 = vshrl.u32 %v237, 7
    %v239 = vsub.s32 %v236, %v238
    %v240 = vrot.slane %v226, %v239
    %v241 = vcombine.high %v233, %v233
    %v242 = vcombine.high %v240, %v240
    %v243 = vcombine.high %v188, %v188
    %v245 = vunpack.c.l.s4 1983009808
    %v246 = vunpack.c.0.s8 %v245
    %v247 = vlaneseq
    %v248 = vshrl.u32 %v247, 7
    %v249 = vsub.s32 %v246, %v248
    %v250 = vrot.slane %v188, %v249
    %v252 = vunpack.c.l.s4 1983009808
    %v253 = vunpack.c.0.s8 %v252
    %v254 = vlaneseq
    %v255 = vshrl.u32 %v254, 7
    %v256 = vsub.s32 %v253, %v255
    %v257 = vrot.slane %v243, %v256
    %v258 = vcombine.high %v250, %v250
    %v259 = vld [vmem:[#allocation2] sm:$0xff]
    %v260 = vld [vmem:[#allocation2 + $0x8] sm:$0xff]
    %v261 = vld [vmem:[#allocation2 + $0x10] sm:$0xff]
    %v262 = vld [vmem:[#allocation2 + $0x18] sm:$0xff]
    %v263 = vld [vmem:[#allocation2 + $0x20] sm:$0xff]
    %v264 = vld [vmem:[#allocation2 + $0x28] sm:$0xff]
    %v265 = vld [vmem:[#allocation2 + $0x30] sm:$0xff]
    %v266 = vld [vmem:[#allocation2 + $0x38] sm:$0xff]
    %v267 = vld [vmem:[#allocation2 + $0x40] sm:$0xff]
    %v268 = vld [vmem:[%s2] sm:$0x7]
    %v270 = vlaneseq
    %v271 = vshrl.u32 %v270, 7
    %v272 = vsub.s32 0, %v271
    %v273 = vrot.slane %v268, %v272
    %v274 = vlaneseq
    %v275 = vshrl.u32 %v274, 7
    %v276 = vsub.s32 1, %v275
    %v277 = vrot.slane %v268, %v276
    %v278 = vlaneseq
    %v279 = vshrl.u32 %v278, 7
    %v280 = vsub.s32 2, %v279
    %v281 = vrot.slane %v268, %v280
    %v285 = vcombine.low %v200, %v208
    %v286 = vcombine.low %v207, %v209
    %v288 = vunpack.c.l.s4 1983009808
    %v289 = vunpack.c.0.s8 %v288
    %v290 = vlaneseq
    %v291 = vshrl.u32 %v290, 7
    %v292 = vsub.s32 %v289, %v291
    %v293 = vrot.slane %v285, %v292
    %v295 = vunpack.c.l.s4 1983009808
    %v296 = vunpack.c.0.s8 %v295
    %v297 = vlaneseq
    %v298 = vshrl.u32 %v297, 7
    %v299 = vsub.s32 %v296, %v298
    %v300 = vrot.slane %v286, %v299
    %v301 = vcombine.low %v293, %v300
    %v302 = vcombine.low %v217, %v225
    %v303 = vcombine.low %v224, %v233
    %v305 = vunpack.c.l.s4 1983009808
    %v306 = vunpack.c.0.s8 %v305
    %v307 = vlaneseq
    %v308 = vshrl.u32 %v307, 7
    %v309 = vsub.s32 %v306, %v308
    %v310 = vrot.slane %v302, %v309
    %v312 = vunpack.c.l.s4 1983009808
    %v313 = vunpack.c.0.s8 %v312
    %v314 = vlaneseq
    %v315 = vshrl.u32 %v314, 7
    %v316 = vsub.s32 %v313, %v315
    %v317 = vrot.slane %v303, %v316
    %v318 = vcombine.low %v310, %v317
    %v319 = vcombine.low %v241, %v240
    %v320 = vcombine.low %v242, %v250
    %v322 = vunpack.c.l.s4 1983009808
    %v323 = vunpack.c.0.s8 %v322
    %v324 = vlaneseq
    %v325 = vshrl.u32 %v324, 7
    %v326 = vsub.s32 %v323, %v325
    %v327 = vrot.slane %v319, %v326
    %v329 = vunpack.c.l.s4 1983009808
    %v330 = vunpack.c.0.s8 %v329
    %v331 = vlaneseq
    %v332 = vshrl.u32 %v331, 7
    %v333 = vsub.s32 %v330, %v332
    %v334 = vrot.slane %v320, %v333
    %v335 = vcombine.low %v327, %v334
    %v336 = vcombine.low %v258, %v257
    %v338 = vunpack.c.l.s4 1983009808
    %v339 = vunpack.c.0.s8 %v338
    %v340 = vlaneseq
    %v341 = vshrl.u32 %v340, 7
    %v342 = vsub.s32 %v339, %v341
    %v343 = vrot.slane %v336, %v342
    %vm344 = vcmask 195584
    %v345 = vsel %vm344, %v301, 0
    %v347 = vsel %vm344, %v318, 0
    %v349 = vsel %vm344, %v335, 0
    %v351 = vsel %vm344, %v343, 0
    %353 = vmatprep.subr.mxu0 %v260
    %354 = vmatpush1.msra.mxu0 %v259
    %355 = vmatprep.subr.mxu0 %v263
    %356 = vmatpush1.msra.mxu0 %v262
    %357 = vmatprep.subr.mxu0 %v266
    %358 = vmatpush1.msra.mxu0 %v265
    %359 = vmatprep.subr.mxu0 0.0
    %360 = vmatpush1.msra.mxu0 0.0
    %361 = vmatprep.subr.mxu0 0.0
    %362 = vmatpush1.msra.mxu0 0.0
    %363 = vmatprep.subr.mxu0 0.0
    %364 = vmatpush1.msra.mxu0 0.0
    %365 = vmatprep.subr.mxu0 0.0
    %366 = vmatpush1.msra.mxu0 0.0
    %367 = vmatprep.subr.mxu0 0.0
    %368 = vmatpush1.msra.mxu0 0.0
    %369 = vmatprep.subr.mxu0 0.0
    %370 = vmatpush1.msra.mxu0 0.0
    %371 = vmatprep.subr.mxu0 0.0
    %372 = vmatpush1.msra.mxu0 0.0
    %373 = vmatprep.subr.mxu0 0.0
    %374 = vmatpush1.msra.mxu0 0.0
    %375 = vmatprep.subr.mxu0 0.0
    %376 = vmatpush1.msra.mxu0 0.0
    %377 = vmatprep.subr.mxu0 0.0
    %378 = vmatpush1.msra.mxu0 0.0
    %379 = vmatprep.subr.mxu0 0.0
    %380 = vmatpush1.msra.mxu0 0.0
    %381 = vmatprep.subr.mxu0 0.0
    %382 = vmatpush1.msra.mxu0 0.0
    %383 = vmatprep.subr.mxu0 0.0
    %384 = vmatpush1.msra.mxu0 0.0
    %385 = vmatprep.subr.mxu0 0.0
    %386 = vmatpush1.msra.mxu0 0.0
    %387 = vmatprep.subr.mxu0 0.0
    %388 = vmatpush1.msra.mxu0 0.0
    %389 = vmatprep.subr.mxu0 0.0
    %390 = vmatpush1.msra.mxu0 0.0
    %391 = vmatprep.subr.mxu0 0.0
    %392 = vmatpush1.msra.mxu0 0.0
    %393 = vmatprep.subr.mxu0 0.0
    %394 = vmatpush1.msra.mxu0 0.0
    %395 = vmatprep.subr.mxu0 0.0
    %396 = vmatpush1.msra.mxu0 0.0
    %397 = vmatprep.subr.mxu0 0.0
    %398 = vmatpush1.msra.mxu0 0.0
    %399 = vmatprep.subr.mxu0 0.0
    %400 = vmatpush1.msra.mxu0 0.0
    %401 = vmatprep.subr.mxu0 0.0
    %402 = vmatpush1.msra.mxu0 0.0
    %403 = vmatprep.subr.mxu0 0.0
    %404 = vmatpush1.msra.mxu0 0.0
    %405 = vmatprep.subr.mxu0 0.0
    %406 = vmatpush1.msra.mxu0 0.0
    %407 = vmatprep.subr.mxu0 0.0
    %408 = vmatpush1.msra.mxu0 0.0
    %409 = vmatprep.subr.mxu0 0.0
    %410 = vmatpush1.msra.mxu0 0.0
    %411 = vmatprep.subr.mxu0 0.0
    %412 = vmatpush1.msra.mxu0 0.0
    %413 = vmatprep.subr.mxu0 0.0
    %414 = vmatpush1.msra.mxu0 0.0
    %415 = vmatprep.subr.mxu0 0.0
    %416 = vmatpush1.msra.mxu0 0.0
    %417 = vmatprep.mubr.f32.mxu0 0.0
    %418 = vmatmul.mubr.f32.gmra.mrb[0].mxu0 %v345
    %v419 = vpop.f32.mrb[0].mxu0
    %v420 = vadd.f32 %v273, %v419
    %v421 = vpop.f32.mrb[0].mxu0
    %v422 = vadd.f32 %v277, %v421
    %423 = vmatprep.mubr.f32.mxu0 0.0
    %424 = vmatmul.mubr.f32.gmra.mrb[0].mxu0 %v347
    %v425 = vpop.f32.mrb[0].mxu0
    %v426 = vadd.f32 %v273, %v425
    %v427 = vpop.f32.mrb[0].mxu0
    %v428 = vadd.f32 %v277, %v427
    %429 = vmatprep.mubr.f32.mxu0 0.0
    %430 = vmatmul.mubr.f32.gmra.mrb[0].mxu0 %v349
    %v431 = vpop.f32.mrb[0].mxu0
    %v432 = vadd.f32 %v273, %v431
    %v433 = vpop.f32.mrb[0].mxu0
    %v434 = vadd.f32 %v277, %v433
    %435 = vmatprep.mubr.f32.mxu0 0.0
    %436 = vmatmul.mubr.f32.gmra.mrb[0].mxu0 %v351
    %v437 = vpop.f32.mrb[0].mxu0
    %v438 = vadd.f32 %v273, %v437
    %v439 = vpop.f32.mrb[0].mxu0
    %v440 = vadd.f32 %v277, %v439
    %441 = vdwg.mxu0
    %442 = vmatprep.subr.mxu0 0.0
    %443 = vmatpush1.msra.mxu0 %v261
    %444 = vmatprep.subr.mxu0 0.0
    %445 = vmatpush1.msra.mxu0 %v264
    %446 = vmatprep.subr.mxu0 0.0
    %447 = vmatpush1.msra.mxu0 %v267
    %448 = vmatprep.subr.mxu0 0.0
    %449 = vmatpush1.msra.mxu0 0.0
    %450 = vmatprep.subr.mxu0 0.0
    %451 = vmatpush1.msra.mxu0 0.0
    %452 = vmatprep.subr.mxu0 0.0
    %453 = vmatpush1.msra.mxu0 0.0
    %454 = vmatprep.subr.mxu0 0.0
    %455 = vmatpush1.msra.mxu0 0.0
    %456 = vmatprep.subr.mxu0 0.0
    %457 = vmatpush1.msra.mxu0 0.0
    %458 = vmatprep.subr.mxu0 0.0
    %459 = vmatpush1.msra.mxu0 0.0
    %460 = vmatprep.subr.mxu0 0.0
    %461 = vmatpush1.msra.mxu0 0.0
    %462 = vmatprep.subr.mxu0 0.0
    %463 = vmatpush1.msra.mxu0 0.0
    %464 = vmatprep.subr.mxu0 0.0
    %465 = vmatpush1.msra.mxu0 0.0
    %466 = vmatprep.subr.mxu0 0.0
    %467 = vmatpush1.msra.mxu0 0.0
    %468 = vmatprep.subr.mxu0 0.0
    %469 = vmatpush1.msra.mxu0 0.0
    %470 = vmatprep.subr.mxu0 0.0
    %471 = vmatpush1.msra.mxu0 0.0
    %472 = vmatprep.subr.mxu0 0.0
    %473 = vmatpush1.msra.mxu0 0.0
    %474 = vmatprep.subr.mxu0 0.0
    %475 = vmatpush1.msra.mxu0 0.0
    %476 = vmatprep.subr.mxu0 0.0
    %477 = vmatpush1.msra.mxu0 0.0
    %478 = vmatprep.subr.mxu0 0.0
    %479 = vmatpush1.msra.mxu0 0.0
    %480 = vmatprep.subr.mxu0 0.0
    %481 = vmatpush1.msra.mxu0 0.0
    %482 = vmatprep.subr.mxu0 0.0
    %483 = vmatpush1.msra.mxu0 0.0
    %484 = vmatprep.subr.mxu0 0.0
    %485 = vmatpush1.msra.mxu0 0.0
    %486 = vmatprep.subr.mxu0 0.0
    %487 = vmatpush1.msra.mxu0 0.0
    %488 = vmatprep.subr.mxu0 0.0
    %489 = vmatpush1.msra.mxu0 0.0
    %490 = vmatprep.subr.mxu0 0.0
    %491 = vmatpush1.msra.mxu0 0.0
    %492 = vmatprep.subr.mxu0 0.0
    %493 = vmatpush1.msra.mxu0 0.0
    %494 = vmatprep.subr.mxu0 0.0
    %495 = vmatpush1.msra.mxu0 0.0
    %496 = vmatprep.subr.mxu0 0.0
    %497 = vmatpush1.msra.mxu0 0.0
    %498 = vmatprep.subr.mxu0 0.0
    %499 = vmatpush1.msra.mxu0 0.0
    %500 = vmatprep.subr.mxu0 0.0
    %501 = vmatpush1.msra.mxu0 0.0
    %502 = vmatprep.subr.mxu0 0.0
    %503 = vmatpush1.msra.mxu0 0.0
    %504 = vmatprep.subr.mxu0 0.0
    %505 = vmatpush1.msra.mxu0 0.0
    %506 = vmatprep.mubr.f32.mxu0 0.0
    %507 = vmatmul.mubr.f32.gmra.mrb[0].mxu0 %v345
    %v508 = vpop.f32.mrb[0].mxu0
    %v509 = vadd.f32 %v281, %v508
    %v510 = vpop.f32.mrb[0].mxu0
    %511 = vmatprep.mubr.f32.mxu0 0.0
    %512 = vmatmul.mubr.f32.gmra.mrb[0].mxu0 %v347
    %v513 = vpop.f32.mrb[0].mxu0
    %v514 = vadd.f32 %v281, %v513
    %v515 = vpop.f32.mrb[0].mxu0
    %516 = vmatprep.mubr.f32.mxu0 0.0
    %517 = vmatmul.mubr.f32.gmra.mrb[0].mxu0 %v349
    %v518 = vpop.f32.mrb[0].mxu0
    %v519 = vadd.f32 %v281, %v518
    %v520 = vpop.f32.mrb[0].mxu0
    %521 = vmatprep.mubr.f32.mxu0 0.0
    %522 = vmatmul.mubr.f32.gmra.mrb[0].mxu0 %v351
    %v523 = vpop.f32.mrb[0].mxu0
    %v524 = vadd.f32 %v281, %v523
    %v525 = vpop.f32.mrb[0].mxu0
    %526 = vdwg.mxu0
    %v527 = vmax.f32 %v420, 0.0
    %v528 = vmax.f32 %v422, 0.0
    %v529 = vmax.f32 %v509, 0.0
    %v530 = vmax.f32 %v426, 0.0
    %v531 = vmax.f32 %v428, 0.0
    %v532 = vmax.f32 %v514, 0.0
    %v533 = vmax.f32 %v432, 0.0
    %v534 = vmax.f32 %v434, 0.0
    %v535 = vmax.f32 %v519, 0.0
    %v536 = vmax.f32 %v438, 0.0
    %v537 = vmax.f32 %v440, 0.0
    %v538 = vmax.f32 %v524, 0.0
    %v551 = vcombine.low %v527, %v528
    %v552 = vcombine.high %v527, %v528
    %v553 = vcombine.high %v529, %v529
    %v555 = vunpack.c.l.s4 1983009808
    %v556 = vunpack.c.0.s8 %v555
    %v557 = vlaneseq
    %v558 = vshrl.u32 %v557, 7
    %v559 = vsub.s32 %v556, %v558
    %v560 = vrot.slane %v551, %v559
    %v562 = vunpack.c.l.s4 1983009808
    %v563 = vunpack.c.0.s8 %v562
    %v564 = vlaneseq
    %v565 = vshrl.u32 %v564, 7
    %v566 = vsub.s32 %v563, %v565
    %v567 = vrot.slane %v552, %v566
    %v569 = vunpack.c.l.s4 1983009808
    %v570 = vunpack.c.0.s8 %v569
    %v571 = vlaneseq
    %v572 = vshrl.u32 %v571, 7
    %v573 = vsub.s32 %v570, %v572
    %v574 = vrot.slane %v529, %v573
    %v576 = vunpack.c.l.s4 1983009808
    %v577 = vunpack.c.0.s8 %v576
    %v578 = vlaneseq
    %v579 = vshrl.u32 %v578, 7
    %v580 = vsub.s32 %v577, %v579
    %v581 = vrot.slane %v553, %v580
    %v582 = vcombine.low %v560, %v574
    %v583 = vcombine.high %v560, %v574
    %v584 = vcombine.low %v567, %v581
    %v585 = vcombine.high %v567, %v581
    %v586 = vcombine.low %v530, %v531
    %v587 = vcombine.high %v530, %v531
    %v588 = vcombine.high %v532, %v532
    %v590 = vunpack.c.l.s4 1983009808
    %v591 = vunpack.c.0.s8 %v590
    %v592 = vlaneseq
    %v593 = vshrl.u32 %v592, 7
    %v594 = vsub.s32 %v591, %v593
    %v595 = vrot.slane %v586, %v594
    %v597 = vunpack.c.l.s4 1983009808
    %v598 = vunpack.c.0.s8 %v597
    %v599 = vlaneseq
    %v600 = vshrl.u32 %v599, 7
    %v601 = vsub.s32 %v598, %v600
    %v602 = vrot.slane %v587, %v601
    %v604 = vunpack.c.l.s4 1983009808
    %v605 = vunpack.c.0.s8 %v604
    %v606 = vlaneseq
    %v607 = vshrl.u32 %v606, 7
    %v608 = vsub.s32 %v605, %v607
    %v609 = vrot.slane %v532, %v608
    %v611 = vunpack.c.l.s4 1983009808
    %v612 = vunpack.c.0.s8 %v611
    %v613 = vlaneseq
    %v614 = vshrl.u32 %v613, 7
    %v615 = vsub.s32 %v612, %v614
    %v616 = vrot.slane %v588, %v615
    %v617 = vcombine.low %v595, %v609
    %v618 = vcombine.high %v595, %v609
    %v619 = vcombine.low %v602, %v616
    %v620 = vcombine.high %v602, %v616
    %v621 = vcombine.low %v533, %v534
    %v622 = vcombine.high %v533, %v534
    %v623 = vcombine.high %v535, %v535
    %v625 = vunpack.c.l.s4 1983009808
    %v626 = vunpack.c.0.s8 %v625
    %v627 = vlaneseq
    %v628 = vshrl.u32 %v627, 7
    %v629 = vsub.s32 %v626, %v628
    %v630 = vrot.slane %v621, %v629
    %v632 = vunpack.c.l.s4 1983009808
    %v633 = vunpack.c.0.s8 %v632
    %v634 = vlaneseq
    %v635 = vshrl.u32 %v634, 7
    %v636 = vsub.s32 %v633, %v635
    %v637 = vrot.slane %v622, %v636
    %v639 = vunpack.c.l.s4 1983009808
    %v640 = vunpack.c.0.s8 %v639
    %v641 = vlaneseq
    %v642 = vshrl.u32 %v641, 7
    %v643 = vsub.s32 %v640, %v642
    %v644 = vrot.slane %v535, %v643
    %v646 = vunpack.c.l.s4 1983009808
    %v647 = vunpack.c.0.s8 %v646
    %v648 = vlaneseq
    %v649 = vshrl.u32 %v648, 7
    %v650 = vsub.s32 %v647, %v649
    %v651 = vrot.slane %v623, %v650
    %v652 = vcombine.low %v630, %v644
    %v653 = vcombine.high %v630, %v644
    %v654 = vcombine.low %v637, %v651
    %v655 = vcombine.high %v637, %v651
    %v656 = vcombine.low %v536, %v537
    %v658 = vunpack.c.l.s4 1983009808
    %v659 = vunpack.c.0.s8 %v658
    %v660 = vlaneseq
    %v661 = vshrl.u32 %v660, 7
    %v662 = vsub.s32 %v659, %v661
    %v663 = vrot.slane %v656, %v662
    %v665 = vunpack.c.l.s4 1983009808
    %v666 = vunpack.c.0.s8 %v665
    %v667 = vlaneseq
    %v668 = vshrl.u32 %v667, 7
    %v669 = vsub.s32 %v666, %v668
    %v670 = vrot.slane %v538, %v669
    %v671 = vcombine.low %v663, %v670
    %v672 = vcombine.high %v663, %v670
    %v673 = vcombine.low %v582, %v583
    %v674 = vcombine.low %v584, %v585
    %v676 = vunpack.c.l.s4 1983009808
    %v677 = vunpack.c.0.s8 %v676
    %v678 = vlaneseq
    %v679 = vshrl.u32 %v678, 7
    %v680 = vsub.s32 %v677, %v679
    %v681 = vrot.slane %v673, %v680
    %v683 = vunpack.c.l.s4 1983009808
    %v684 = vunpack.c.0.s8 %v683
    %v685 = vlaneseq
    %v686 = vshrl.u32 %v685, 7
    %v687 = vsub.s32 %v684, %v686
    %v688 = vrot.slane %v674, %v687
    %v689 = vcombine.low %v681, %v688
    %v690 = vcombine.low %v617, %v618
    %v692 = vunpack.c.l.s4 1983009808
    %v693 = vunpack.c.0.s8 %v692
    %v694 = vlaneseq
    %v695 = vshrl.u32 %v694, 7
    %v696 = vsub.s32 %v693, %v695
    %v697 = vrot.slane %v690, %v696
    %v699 = vunpack.c.l.s4 1983009808
    %v700 = vunpack.c.0.s8 %v699
    %v701 = vlaneseq
    %v702 = vshrl.u32 %v701, 7
    %v703 = vsub.s32 %v700, %v702
    %v704 = vrot.slane %v619, %v703
    %v705 = vcombine.low %v697, %v704
    %v706 = vcombine.low %v620, %v652
    %v707 = vcombine.low %v653, %v654
    %v709 = vunpack.c.l.s4 1983009808
    %v710 = vunpack.c.0.s8 %v709
    %v711 = vlaneseq
    %v712 = vshrl.u32 %v711, 7
    %v713 = vsub.s32 %v710, %v712
    %v714 = vrot.slane %v706, %v713
    %v716 = vunpack.c.l.s4 1983009808
    %v717 = vunpack.c.0.s8 %v716
    %v718 = vlaneseq
    %v719 = vshrl.u32 %v718, 7
    %v720 = vsub.s32 %v717, %v719
    %v721 = vrot.slane %v707, %v720
    %v722 = vcombine.low %v714, %v721
    %v723 = vcombine.low %v655, %v671
    %v725 = vunpack.c.l.s4 1983009808
    %v726 = vunpack.c.0.s8 %v725
    %v727 = vlaneseq
    %v728 = vshrl.u32 %v727, 7
    %v729 = vsub.s32 %v726, %v728
    %v730 = vrot.slane %v723, %v729
    %v732 = vunpack.c.l.s4 1983009808
    %v733 = vunpack.c.0.s8 %v732
    %v734 = vlaneseq
    %v735 = vshrl.u32 %v734, 7
    %v736 = vsub.s32 %v733, %v735
    %v737 = vrot.slane %v672, %v736
    %v738 = vcombine.low %v730, %v737
    %v743 = vsel %vm160, %v705, -inf
    %v744 = vmax.f32 %v689, %v743
    %v745 = vrot.slane %v744, 4
    %v746 = vmax.f32 %v744, %v745
    %v747 = vrot.slane %v746, 2
    %v748 = vmax.f32 %v746, %v747
    %v749 = vrot.slane %v748, 1
    %v750 = vmax.f32 %v748, %v749
    %v751 = vsel %vm160, %v738, -inf
    %v752 = vmax.f32 %v722, %v751
    %v753 = vrot.slane %v752, 4
    %v754 = vmax.f32 %v752, %v753
    %v755 = vrot.slane %v754, 2
    %v756 = vmax.f32 %v754, %v755
    %v757 = vrot.slane %v756, 1
    %v758 = vmax.f32 %v756, %v757
    %v759 = vcombine.high %v681, %v688
    %v760 = vcombine.high %v697, %v697
    %v761 = vcombine.high %v714, %v721
    %v762 = vcombine.high %v730, %v730
    %v763 = vcombine.high %v697, %v704
    %v764 = vcombine.high %v730, %v737
    %v765 = vrot.slane %v759, 1
    %v766 = vrot.slane %v763, 1
    %v767 = vsel %vm141, %v765, %v766
    %v768 = vrot.slane %v761, 1
    %v769 = vrot.slane %v764, 1
    %v770 = vsel %vm141, %v768, %v769
    %v771 = vcombine.low %v583, %v584
    %v772 = vcombine.low %v585, %v617
    %v774 = vunpack.c.l.s4 1983009808
    %v775 = vunpack.c.0.s8 %v774
    %v776 = vlaneseq
    %v777 = vshrl.u32 %v776, 7
    %v778 = vsub.s32 %v775, %v777
    %v779 = vrot.slane %v771, %v778
    %v781 = vunpack.c.l.s4 1983009808
    %v782 = vunpack.c.0.s8 %v781
    %v783 = vlaneseq
    %v784 = vshrl.u32 %v783, 7
    %v785 = vsub.s32 %v782, %v784
    %v786 = vrot.slane %v772, %v785
    %v787 = vcombine.high %v779, %v786
    %v788 = vcombine.low %v618, %v619
    %v790 = vunpack.c.l.s4 1983009808
    %v791 = vunpack.c.0.s8 %v790
    %v792 = vlaneseq
    %v793 = vshrl.u32 %v792, 7
    %v794 = vsub.s32 %v791, %v793
    %v795 = vrot.slane %v788, %v794
    %v796 = vcombine.high %v795, %v795
    %v797 = vcombine.low %v652, %v653
    %v798 = vcombine.low %v654, %v655
    %v800 = vunpack.c.l.s4 1983009808
    %v801 = vunpack.c.0.s8 %v800
    %v802 = vlaneseq
    %v803 = vshrl.u32 %v802, 7
    %v804 = vsub.s32 %v801, %v803
    %v805 = vrot.slane %v797, %v804
    %v807 = vunpack.c.l.s4 1983009808
    %v808 = vunpack.c.0.s8 %v807
    %v809 = vlaneseq
    %v810 = vshrl.u32 %v809, 7
    %v811 = vsub.s32 %v808, %v810
    %v812 = vrot.slane %v798, %v811
    %v813 = vcombine.high %v805, %v812
    %v814 = vcombine.low %v671, %v672
    %v816 = vunpack.c.l.s4 1983009808
    %v817 = vunpack.c.0.s8 %v816
    %v818 = vlaneseq
    %v819 = vshrl.u32 %v818, 7
    %v820 = vsub.s32 %v817, %v819
    %v821 = vrot.slane %v814, %v820
    %v822 = vcombine.high %v821, %v821
    %v823 = vcombine.low %v759, %v767
    %v824 = vcombine.high %v759, %v767
    %v825 = vcombine.high %v787, %v787
    %v826 = vcombine.low %v760, %v766
    %v827 = vcombine.low %v761, %v770
    %v828 = vcombine.high %v761, %v770
    %v829 = vcombine.high %v813, %v813
    %v830 = vcombine.low %v762, %v769
    %v831 = vld [vmem:[#allocation5] sm:$0xff]
    %v832 = vld [vmem:[#allocation5 + $0x8] sm:$0xff]
    %v833 = vld [vmem:[#allocation5 + $0x10] sm:$0xff]
    %v834 = vld [vmem:[#allocation5 + $0x18] sm:$0xff]
    %v835 = vld [vmem:[#allocation5 + $0x20] sm:$0xff]
    %v836 = vld [vmem:[#allocation5 + $0x28] sm:$0xff]
    %v837 = vld [vmem:[#allocation5 + $0x30] sm:$0xff]
    %v838 = vld [vmem:[#allocation5 + $0x38] sm:$0xff]
    %v839 = vld [vmem:[#allocation5 + $0x40] sm:$0xff]
    %v840 = vld [vmem:[#allocation5 + $0x48] sm:$0xff]
    %v841 = vld [vmem:[#allocation5 + $0x50] sm:$0xff]
    %v842 = vld [vmem:[#allocation5 + $0x58] sm:$0xff]
    %v843 = vld [vmem:[#allocation5 + $0x60] sm:$0xff]
    %v844 = vld [vmem:[#allocation5 + $0x68] sm:$0xff]
    %v845 = vld [vmem:[#allocation5 + $0x70] sm:$0xff]
    %v846 = vld [vmem:[#allocation5 + $0x78] sm:$0xff]
    %v847 = vld [vmem:[#allocation5 + $0x80] sm:$0xff]
    %v848 = vld [vmem:[#allocation5 + $0x88] sm:$0xff]
    %v849 = vld [vmem:[#allocation5 + $0x90] sm:$0xff]
    %v850 = vld [vmem:[#allocation5 + $0x98] sm:$0xff]
    %v851 = vld [vmem:[#allocation5 + $0xa0] sm:$0xff]
    %v852 = vld [vmem:[#allocation5 + $0xa8] sm:$0xff]
    %v853 = vld [vmem:[#allocation5 + $0xb0] sm:$0xff]
    %v854 = vld [vmem:[#allocation5 + $0xb8] sm:$0xff]
    %v855 = vld [vmem:[#allocation5 + $0xc0] sm:$0xff]
    %v856 = vld [vmem:[#allocation5 + $0xc8] sm:$0xff]
    %v857 = vld [vmem:[#allocation5 + $0xd0] sm:$0xff]
    %v858 = vld [vmem:[#allocation5 + $0xd8] sm:$0xff]
    %v859 = vld [vmem:[#allocation5 + $0xe0] sm:$0xff]
    %v860 = vld [vmem:[#allocation5 + $0xe8] sm:$0xff]
    %v861 = vld [vmem:[#allocation5 + $0xf0] sm:$0xff]
    %v862 = vld [vmem:[#allocation5 + $0xf8] sm:$0xff]
    %v863 = vld [vmem:[#allocation5 + $0x100] sm:$0xff]
    %v864 = vld [vmem:[#allocation5 + $0x108] sm:$0xff]
    %v865 = vld [vmem:[#allocation5 + $0x110] sm:$0xff]
    %v866 = vld [vmem:[#allocation5 + $0x118] sm:$0xff]
    %v867 = vld [vmem:[#allocation5 + $0x120] sm:$0xff]
    %v868 = vld [vmem:[#allocation5 + $0x128] sm:$0xff]
    %v869 = vld [vmem:[#allocation5 + $0x130] sm:$0xff]
    %v870 = vld [vmem:[#allocation5 + $0x138] sm:$0xff]
    %v871 = vld [vmem:[#allocation5 + $0x140] sm:$0xff]
    %v872 = vld [vmem:[#allocation5 + $0x148] sm:$0xff]
    %v873 = vld [vmem:[#allocation5 + $0x150] sm:$0xff]
    %v874 = vld [vmem:[#allocation5 + $0x158] sm:$0xff]
    %v875 = vld [vmem:[#allocation5 + $0x160] sm:$0xff]
    %v876 = vld [vmem:[#allocation5 + $0x168] sm:$0xff]
    %v877 = vld [vmem:[#allocation5 + $0x170] sm:$0xff]
    %v878 = vld [vmem:[#allocation5 + $0x178] sm:$0xff]
    %v879 = vld [vmem:[%s6] sm:$0x1]
    %v881 = vlaneseq
    %v882 = vshrl.u32 %v881, 7
    %v883 = vsub.s32 0, %v882
    %v884 = vrot.slane %v879, %v883
    %v886 = vcombine.low %v823, %v824
    %v887 = vcombine.high %v823, %v824
    %v888 = vcombine.low %v787, %v825
    %v889 = vcombine.low %v826, %v827
    %v890 = vcombine.high %v826, %v827
    %v891 = vcombine.low %v796, %v813
    %v892 = vcombine.low %v828, %v830
    %v893 = vcombine.high %v828, %v830
    %v894 = vcombine.low %v829, %v822
    %904 = vmatprep.subr.mxu0 0.0
    %905 = vmatpush1.msra.mxu0 %v831
    %906 = vmatprep.subr.mxu0 0.0
    %907 = vmatpush1.msra.mxu0 %v832
    %908 = vmatprep.subr.mxu0 0.0
    %909 = vmatpush1.msra.mxu0 %v833
    %910 = vmatprep.subr.mxu0 0.0
    %911 = vmatpush1.msra.mxu0 %v834
    %912 = vmatprep.subr.mxu0 0.0
    %913 = vmatpush1.msra.mxu0 %v835
    %914 = vmatprep.subr.mxu0 0.0
    %915 = vmatpush1.msra.mxu0 %v836
    %916 = vmatprep.subr.mxu0 0.0
    %917 = vmatpush1.msra.mxu0 %v837
    %918 = vmatprep.subr.mxu0 0.0
    %919 = vmatpush1.msra.mxu0 %v838
    %920 = vmatprep.subr.mxu0 0.0
    %921 = vmatpush1.msra.mxu0 %v839
    %922 = vmatprep.subr.mxu0 0.0
    %923 = vmatpush1.msra.mxu0 %v840
    %924 = vmatprep.subr.mxu0 0.0
    %925 = vmatpush1.msra.mxu0 %v841
    %926 = vmatprep.subr.mxu0 0.0
    %927 = vmatpush1.msra.mxu0 %v842
    %928 = vmatprep.subr.mxu0 0.0
    %929 = vmatpush1.msra.mxu0 %v843
    %930 = vmatprep.subr.mxu0 0.0
    %931 = vmatpush1.msra.mxu0 %v844
    %932 = vmatprep.subr.mxu0 0.0
    %933 = vmatpush1.msra.mxu0 %v845
    %934 = vmatprep.subr.mxu0 0.0
    %935 = vmatpush1.msra.mxu0 %v846
    %936 = vmatprep.subr.mxu0 0.0
    %937 = vmatpush1.msra.mxu0 %v847
    %938 = vmatprep.subr.mxu0 0.0
    %939 = vmatpush1.msra.mxu0 %v848
    %940 = vmatprep.subr.mxu0 0.0
    %941 = vmatpush1.msra.mxu0 %v849
    %942 = vmatprep.subr.mxu0 0.0
    %943 = vmatpush1.msra.mxu0 %v850
    %944 = vmatprep.subr.mxu0 0.0
    %945 = vmatpush1.msra.mxu0 %v851
    %946 = vmatprep.subr.mxu0 0.0
    %947 = vmatpush1.msra.mxu0 %v852
    %948 = vmatprep.subr.mxu0 0.0
    %949 = vmatpush1.msra.mxu0 %v853
    %950 = vmatprep.subr.mxu0 0.0
    %951 = vmatpush1.msra.mxu0 %v854
    %952 = vmatprep.subr.mxu0 0.0
    %953 = vmatpush1.msra.mxu0 %v855
    %954 = vmatprep.subr.mxu0 0.0
    %955 = vmatpush1.msra.mxu0 %v856
    %956 = vmatprep.subr.mxu0 0.0
    %957 = vmatpush1.msra.mxu0 %v857
    %958 = vmatprep.subr.mxu0 0.0
    %959 = vmatpush1.msra.mxu0 %v858
    %960 = vmatprep.subr.mxu0 0.0
    %961 = vmatpush1.msra.mxu0 %v859
    %962 = vmatprep.subr.mxu0 0.0
    %963 = vmatpush1.msra.mxu0 %v860
    %964 = vmatprep.subr.mxu0 0.0
    %965 = vmatpush1.msra.mxu0 %v861
    %966 = vmatprep.subr.mxu0 0.0
    %967 = vmatpush1.msra.mxu0 %v862
    %968 = vmatprep.mubr.f32.mxu0 %v887
    %969 = vmatmul.mubr.f32.gmra.mrb[0].mxu0 %v886
    %v970 = vpop.f32.mrb[0].mxu0
    %v971 = vadd.f32 %v884, %v970
    %v972 = vpop.f32.mrb[0].mxu0
    %973 = vmatprep.mubr.f32.mxu0 %v890
    %974 = vmatmul.mubr.f32.gmra.mrb[0].mxu0 %v889
    %v975 = vpop.f32.mrb[0].mxu0
    %v976 = vadd.f32 %v884, %v975
    %v977 = vpop.f32.mrb[0].mxu0
    %978 = vmatprep.mubr.f32.mxu0 %v893
    %979 = vmatmul.mubr.f32.gmra.mrb[0].mxu0 %v892
    %v980 = vpop.f32.mrb[0].mxu0
    %v981 = vadd.f32 %v884, %v980
    %v982 = vpop.f32.mrb[0].mxu0
    %983 = vdwg.mxu0
    %984 = vmatprep.subr.mxu0 0.0
    %985 = vmatpush1.msra.mxu0 %v863
    %986 = vmatprep.subr.mxu0 0.0
    %987 = vmatpush1.msra.mxu0 %v864
    %988 = vmatprep.subr.mxu0 0.0
    %989 = vmatpush1.msra.mxu0 %v865
    %990 = vmatprep.subr.mxu0 0.0
    %991 = vmatpush1.msra.mxu0 %v866
    %992 = vmatprep.subr.mxu0 0.0
    %993 = vmatpush1.msra.mxu0 %v867
    %994 = vmatprep.subr.mxu0 0.0
    %995 = vmatpush1.msra.mxu0 %v868
    %996 = vmatprep.subr.mxu0 0.0
    %997 = vmatpush1.msra.mxu0 %v869
    %998 = vmatprep.subr.mxu0 0.0
    %999 = vmatpush1.msra.mxu0 %v870
    %1000 = vmatprep.subr.mxu0 0.0
    %1001 = vmatpush1.msra.mxu0 %v871
    %1002 = vmatprep.subr.mxu0 0.0
    %1003 = vmatpush1.msra.mxu0 %v872
    %1004 = vmatprep.subr.mxu0 0.0
    %1005 = vmatpush1.msra.mxu0 %v873
    %1006 = vmatprep.subr.mxu0 0.0
    %1007 = vmatpush1.msra.mxu0 %v874
    %1008 = vmatprep.subr.mxu0 0.0
    %1009 = vmatpush1.msra.mxu0 %v875
    %1010 = vmatprep.subr.mxu0 0.0
    %1011 = vmatpush1.msra.mxu0 %v876
    %1012 = vmatprep.subr.mxu0 0.0
    %1013 = vmatpush1.msra.mxu0 %v877
    %1014 = vmatprep.subr.mxu0 0.0
    %1015 = vmatpush1.msra.mxu0 %v878
    %1016 = vmatprep.subr.mxu0 0.0
    %1017 = vmatpush1.msra.mxu0 0.0
    %1018 = vmatprep.subr.mxu0 0.0
    %1019 = vmatpush1.msra.mxu0 0.0
    %1020 = vmatprep.subr.mxu0 0.0
    %1021 = vmatpush1.msra.mxu0 0.0
    %1022 = vmatprep.subr.mxu0 0.0
    %1023 = vmatpush1.msra.mxu0 0.0
    %1024 = vmatprep.subr.mxu0 0.0
    %1025 = vmatpush1.msra.mxu0 0.0
    %1026 = vmatprep.subr.mxu0 0.0
    %1027 = vmatpush1.msra.mxu0 0.0
    %1028 = vmatprep.subr.mxu0 0.0
    %1029 = vmatpush1.msra.mxu0 0.0
    %1030 = vmatprep.subr.mxu0 0.0
    %1031 = vmatpush1.msra.mxu0 0.0
    %1032 = vmatprep.subr.mxu0 0.0
    %1033 = vmatpush1.msra.mxu0 0.0
    %1034 = vmatprep.subr.mxu0 0.0
    %1035 = vmatpush1.msra.mxu0 0.0
    %1036 = vmatprep.subr.mxu0 0.0
    %1037 = vmatpush1.msra.mxu0 0.0
    %1038 = vmatprep.subr.mxu0 0.0
    %1039 = vmatpush1.msra.mxu0 0.0
    %1040 = vmatprep.subr.mxu0 0.0
    %1041 = vmatpush1.msra.mxu0 0.0
    %1042 = vmatprep.subr.mxu0 0.0
    %1043 = vmatpush1.msra.mxu0 0.0
    %1044 = vmatprep.subr.mxu0 0.0
    %1045 = vmatpush1.msra.mxu0 0.0
    %1046 = vmatprep.subr.mxu0 0.0
    %1047 = vmatpush1.msra.mxu0 0.0
    %1048 = vmatprep.mubr.f32.mxu0 0.0
    %1049 = vmatmul.mubr.f32.gmra.mrb[0].mxu0 %v888
    %v1050 = vpop.f32.mrb[0].mxu0
    %v1051 = vadd.f32 %v971, %v1050
    %v1052 = vpop.f32.mrb[0].mxu0
    %1053 = vmatprep.mubr.f32.mxu0 0.0
    %1054 = vmatmul.mubr.f32.gmra.mrb[0].mxu0 %v891
    %v1055 = vpop.f32.mrb[0].mxu0
    %v1056 = vadd.f32 %v976, %v1055
    %v1057 = vpop.f32.mrb[0].mxu0
    %1058 = vmatprep.mubr.f32.mxu0 0.0
    %1059 = vmatmul.mubr.f32.gmra.mrb[0].mxu0 %v894
    %v1060 = vpop.f32.mrb[0].mxu0
    %v1061 = vadd.f32 %v981, %v1060
    %v1062 = vpop.f32.mrb[0].mxu0
    %1063 = vdwg.mxu0
    %v1064 = vmax.f32 %v1051, 0.0
    %v1065 = vmax.f32 %v1056, 0.0
    %v1066 = vmax.f32 %v1061, 0.0
    %v1070 = vcombine.high %v1064, %v1064
    %v1071 = vcombine.high %v1065, %v1065
    %v1072 = vcombine.high %v1066, %v1066
    %v1074 = vcombine.low %v1064, %v1070
    %v1075 = vcombine.low %v1071, %v1066
    %vm1078 = vcmask 1043456
    %v1079 = vsel %vm1078, %v1065, -inf
    %v1080 = vmax.f32 %v1074, %v1079
    %v1081 = vrot.slane %v1080, 4
    %v1082 = vmax.f32 %v1080, %v1081
    %v1083 = vrot.slane %v1082, 2
    %v1084 = vmax.f32 %v1082, %v1083
    %v1085 = vrot.slane %v1084, 1
    %v1086 = vmax.f32 %v1084, %v1085
    %v1087 = vsel %vm1078, %v1072, -inf
    %v1088 = vmax.f32 %v1075, %v1087
    %v1089 = vrot.slane %v1088, 4
    %v1090 = vmax.f32 %v1088, %v1089
    %v1091 = vrot.slane %v1090, 2
    %v1092 = vmax.f32 %v1090, %v1091
    %v1093 = vrot.slane %v1092, 1
    %v1094 = vmax.f32 %v1092, %v1093
    %v1095 = vcombine.high %v582, %v583
    %v1096 = vcombine.high %v584, %v585
    %v1098 = vunpack.c.l.s4 1983009808
    %v1099 = vunpack.c.0.s8 %v1098
    %v1100 = vlaneseq
    %v1101 = vshrl.u32 %v1100, 7
    %v1102 = vsub.s32 %v1099, %v1101
    %v1103 = vrot.slane %v1095, %v1102
    %v1105 = vunpack.c.l.s4 1983009808
    %v1106 = vunpack.c.0.s8 %v1105
    %v1107 = vlaneseq
    %v1108 = vshrl.u32 %v1107, 7
    %v1109 = vsub.s32 %v1106, %v1108
    %v1110 = vrot.slane %v1096, %v1109
    %v1111 = vcombine.low %v1103, %v1110
    %v1112 = vcombine.high %v617, %v618
    %v1114 = vunpack.c.l.s4 1983009808
    %v1115 = vunpack.c.0.s8 %v1114
    %v1116 = vlaneseq
    %v1117 = vshrl.u32 %v1116, 7
    %v1118 = vsub.s32 %v1115, %v1117
    %v1119 = vrot.slane %v1112, %v1118
    %v1120 = vcombine.high %v620, %v652
    %v1121 = vcombine.high %v653, %v654
    %v1123 = vunpack.c.l.s4 1983009808
    %v1124 = vunpack.c.0.s8 %v1123
    %v1125 = vlaneseq
    %v1126 = vshrl.u32 %v1125, 7
    %v1127 = vsub.s32 %v1124, %v1126
    %v1128 = vrot.slane %v1120, %v1127
    %v1130 = vunpack.c.l.s4 1983009808
    %v1131 = vunpack.c.0.s8 %v1130
    %v1132 = vlaneseq
    %v1133 = vshrl.u32 %v1132, 7
    %v1134 = vsub.s32 %v1131, %v1133
    %v1135 = vrot.slane %v1121, %v1134
    %v1136 = vcombine.low %v1128, %v1135
    %v1137 = vcombine.high %v655, %v671
    %v1139 = vunpack.c.l.s4 1983009808
    %v1140 = vunpack.c.0.s8 %v1139
    %v1141 = vlaneseq
    %v1142 = vshrl.u32 %v1141, 7
    %v1143 = vsub.s32 %v1140, %v1142
    %v1144 = vrot.slane %v1137, %v1143
    %v1145 = vcombine.high %v619, %v619
    %v1147 = vunpack.c.l.s4 1983009808
    %v1148 = vunpack.c.0.s8 %v1147
    %v1149 = vlaneseq
    %v1150 = vshrl.u32 %v1149, 7
    %v1151 = vsub.s32 %v1148, %v1150
    %v1152 = vrot.slane %v1145, %v1151
    %v1153 = vcombine.low %v1119, %v1152
    %v1154 = vcombine.high %v672, %v672
    %v1156 = vunpack.c.l.s4 1983009808
    %v1157 = vunpack.c.0.s8 %v1156
    %v1158 = vlaneseq
    %v1159 = vshrl.u32 %v1158, 7
    %v1160 = vsub.s32 %v1157, %v1159
    %v1161 = vrot.slane %v1154, %v1160
    %v1162 = vcombine.low %v1144, %v1161
    %v1163 = vrot.slane %v1111, 1
    %v1164 = vrot.slane %v1153, 1
    %v1165 = vsel %vm141, %v1163, %v1164
    %v1166 = vrot.slane %v1136, 1
    %v1167 = vrot.slane %v1162, 1
    %v1168 = vsel %vm141, %v1166, %v1167
    %v1169 = vcombine.high %v583, %v584
    %v1170 = vcombine.high %v585, %v617
    %v1172 = vunpack.c.l.s4 1983009808
    %v1173 = vunpack.c.0.s8 %v1172
    %v1174 = vlaneseq
    %v1175 = vshrl.u32 %v1174, 7
    %v1176 = vsub.s32 %v1173, %v1175
    %v1177 = vrot.slane %v1169, %v1176
    %v1179 = vunpack.c.l.s4 1983009808
    %v1180 = vunpack.c.0.s8 %v1179
    %v1181 = vlaneseq
    %v1182 = vshrl.u32 %v1181, 7
    %v1183 = vsub.s32 %v1180, %v1182
    %v1184 = vrot.slane %v1170, %v1183
    %v1185 = vcombine.low %v1177, %v1184
    %v1186 = vcombine.high %v618, %v619
    %v1188 = vunpack.c.l.s4 1983009808
    %v1189 = vunpack.c.0.s8 %v1188
    %v1190 = vlaneseq
    %v1191 = vshrl.u32 %v1190, 7
    %v1192 = vsub.s32 %v1189, %v1191
    %v1193 = vrot.slane %v1186, %v1192
    %v1194 = vcombine.high %v652, %v653
    %v1195 = vcombine.high %v654, %v655
    %v1197 = vunpack.c.l.s4 1983009808
    %v1198 = vunpack.c.0.s8 %v1197
    %v1199 = vlaneseq
    %v1200 = vshrl.u32 %v1199, 7
    %v1201 = vsub.s32 %v1198, %v1200
    %v1202 = vrot.slane %v1194, %v1201
    %v1204 = vunpack.c.l.s4 1983009808
    %v1205 = vunpack.c.0.s8 %v1204
    %v1206 = vlaneseq
    %v1207 = vshrl.u32 %v1206, 7
    %v1208 = vsub.s32 %v1205, %v1207
    %v1209 = vrot.slane %v1195, %v1208
    %v1210 = vcombine.low %v1202, %v1209
    %v1211 = vcombine.high %v671, %v672
    %v1213 = vunpack.c.l.s4 1983009808
    %v1214 = vunpack.c.0.s8 %v1213
    %v1215 = vlaneseq
    %v1216 = vshrl.u32 %v1215, 7
    %v1217 = vsub.s32 %v1214, %v1216
    %v1218 = vrot.slane %v1211, %v1217
    %v1219 = vcombine.low %v1111, %v1165
    %v1220 = vcombine.high %v1111, %v1165
    %v1221 = vcombine.high %v1185, %v1185
    %v1222 = vcombine.low %v1119, %v1164
    %v1223 = vcombine.low %v1136, %v1168
    %v1224 = vcombine.high %v1136, %v1168
    %v1225 = vcombine.high %v1210, %v1210
    %v1226 = vcombine.low %v1144, %v1167
    %v1227 = vld [vmem:[#allocation7] sm:$0xff]
    %v1228 = vld [vmem:[#allocation7 + $0x8] sm:$0xff]
    %v1229 = vld [vmem:[#allocation7 + $0x10] sm:$0xff]
    %v1230 = vld [vmem:[#allocation7 + $0x18] sm:$0xff]
    %v1231 = vld [vmem:[#allocation7 + $0x20] sm:$0xff]
    %v1232 = vld [vmem:[#allocation7 + $0x28] sm:$0xff]
    %v1233 = vld [vmem:[#allocation7 + $0x30] sm:$0xff]
    %v1234 = vld [vmem:[#allocation7 + $0x38] sm:$0xff]
    %v1235 = vld [vmem:[#allocation7 + $0x40] sm:$0xff]
    %v1236 = vld [vmem:[#allocation7 + $0x48] sm:$0xff]
    %v1237 = vld [vmem:[#allocation7 + $0x50] sm:$0xff]
    %v1238 = vld [vmem:[#allocation7 + $0x58] sm:$0xff]
    %v1239 = vld [vmem:[#allocation7 + $0x60] sm:$0xff]
    %v1240 = vld [vmem:[#allocation7 + $0x68] sm:$0xff]
    %v1241 = vld [vmem:[#allocation7 + $0x70] sm:$0xff]
    %v1242 = vld [vmem:[#allocation7 + $0x78] sm:$0xff]
    %v1243 = vld [vmem:[#allocation7 + $0x80] sm:$0xff]
    %v1244 = vld [vmem:[#allocation7 + $0x88] sm:$0xff]
    %v1245 = vld [vmem:[#allocation7 + $0x90] sm:$0xff]
    %v1246 = vld [vmem:[#allocation7 + $0x98] sm:$0xff]
    %v1247 = vld [vmem:[#allocation7 + $0xa0] sm:$0xff]
    %v1248 = vld [vmem:[#allocation7 + $0xa8] sm:$0xff]
    %v1249 = vld [vmem:[#allocation7 + $0xb0] sm:$0xff]
    %v1250 = vld [vmem:[#allocation7 + $0xb8] sm:$0xff]
    %v1251 = vld [vmem:[#allocation7 + $0xc0] sm:$0xff]
    %v1252 = vld [vmem:[#allocation7 + $0xc8] sm:$0xff]
    %v1253 = vld [vmem:[#allocation7 + $0xd0] sm:$0xff]
    %v1254 = vld [vmem:[#allocation7 + $0xd8] sm:$0xff]
    %v1255 = vld [vmem:[#allocation7 + $0xe0] sm:$0xff]
    %v1256 = vld [vmem:[#allocation7 + $0xe8] sm:$0xff]
    %v1257 = vld [vmem:[#allocation7 + $0xf0] sm:$0xff]
    %v1258 = vld [vmem:[#allocation7 + $0xf8] sm:$0xff]
    %v1259 = vld [vmem:[#allocation7 + $0x100] sm:$0xff]
    %v1260 = vld [vmem:[#allocation7 + $0x108] sm:$0xff]
    %v1261 = vld [vmem:[#allocation7 + $0x110] sm:$0xff]
    %v1262 = vld [vmem:[#allocation7 + $0x118] sm:$0xff]
    %v1263 = vld [vmem:[#allocation7 + $0x120] sm:$0xff]
    %v1264 = vld [vmem:[#allocation7 + $0x128] sm:$0xff]
    %v1265 = vld [vmem:[#allocation7 + $0x130] sm:$0xff]
    %v1266 = vld [vmem:[#allocation7 + $0x138] sm:$0xff]
    %v1267 = vld [vmem:[#allocation7 + $0x140] sm:$0xff]
    %v1268 = vld [vmem:[#allocation7 + $0x148] sm:$0xff]
    %v1269 = vld [vmem:[#allocation7 + $0x150] sm:$0xff]
    %v1270 = vld [vmem:[#allocation7 + $0x158] sm:$0xff]
    %v1271 = vld [vmem:[#allocation7 + $0x160] sm:$0xff]
    %v1272 = vld [vmem:[#allocation7 + $0x168] sm:$0xff]
    %v1273 = vld [vmem:[#allocation7 + $0x170] sm:$0xff]
    %v1274 = vld [vmem:[#allocation7 + $0x178] sm:$0xff]
    %v1275 = vld [vmem:[%s7] sm:$0x1]
    %v1277 = vlaneseq
    %v1278 = vshrl.u32 %v1277, 7
    %v1279 = vsub.s32 0, %v1278
    %v1280 = vrot.slane %v1275, %v1279
    %v1282 = vcombine.low %v1219, %v1220
    %v1283 = vcombine.high %v1219, %v1220
    %v1284 = vcombine.low %v1185, %v1221
    %v1285 = vcombine.low %v1222, %v1223
    %v1286 = vcombine.high %v1222, %v1223
    %v1287 = vcombine.low %v1193, %v1210
    %v1288 = vcombine.low %v1224, %v1226
    %v1289 = vcombine.high %v1224, %v1226
    %v1290 = vcombine.low %v1225, %v1218
    %1300 = vmatprep.subr.mxu0 0.0
    %1301 = vmatpush1.msra.mxu0 %v1227
    %1302 = vmatprep.subr.mxu0 0.0
    %1303 = vmatpush1.msra.mxu0 %v1228
    %1304 = vmatprep.subr.mxu0 0.0
    %1305 = vmatpush1.msra.mxu0 %v1229
    %1306 = vmatprep.subr.mxu0 0.0
    %1307 = vmatpush1.msra.mxu0 %v1230
    %1308 = vmatprep.subr.mxu0 0.0
    %1309 = vmatpush1.msra.mxu0 %v1231
    %1310 = vmatprep.subr.mxu0 0.0
    %1311 = vmatpush1.msra.mxu0 %v1232
    %1312 = vmatprep.subr.mxu0 0.0
    %1313 = vmatpush1.msra.mxu0 %v1233
    %1314 = vmatprep.subr.mxu0 0.0
    %1315 = vmatpush1.msra.mxu0 %v1234
    %1316 = vmatprep.subr.mxu0 0.0
    %1317 = vmatpush1.msra.mxu0 %v1235
    %1318 = vmatprep.subr.mxu0 0.0
    %1319 = vmatpush1.msra.mxu0 %v1236
    %1320 = vmatprep.subr.mxu0 0.0
    %1321 = vmatpush1.msra.mxu0 %v1237
    %1322 = vmatprep.subr.mxu0 0.0
    %1323 = vmatpush1.msra.mxu0 %v1238
    %1324 = vmatprep.subr.mxu0 0.0
    %1325 = vmatpush1.msra.mxu0 %v1239
    %1326 = vmatprep.subr.mxu0 0.0
    %1327 = vmatpush1.msra.mxu0 %v1240
    %1328 = vmatprep.subr.mxu0 0.0
    %1329 = vmatpush1.msra.mxu0 %v1241
    %1330 = vmatprep.subr.mxu0 0.0
    %1331 = vmatpush1.msra.mxu0 %v1242
    %1332 = vmatprep.subr.mxu0 0.0
    %1333 = vmatpush1.msra.mxu0 %v1243
    %1334 = vmatprep.subr.mxu0 0.0
    %1335 = vmatpush1.msra.mxu0 %v1244
    %1336 = vmatprep.subr.mxu0 0.0
    %1337 = vmatpush1.msra.mxu0 %v1245
    %1338 = vmatprep.subr.mxu0 0.0
    %1339 = vmatpush1.msra.mxu0 %v1246
    %1340 = vmatprep.subr.mxu0 0.0
    %1341 = vmatpush1.msra.mxu0 %v1247
    %1342 = vmatprep.subr.mxu0 0.0
    %1343 = vmatpush1.msra.mxu0 %v1248
    %1344 = vmatprep.subr.mxu0 0.0
    %1345 = vmatpush1.msra.mxu0 %v1249
    %1346 = vmatprep.subr.mxu0 0.0
    %1347 = vmatpush1.msra.mxu0 %v1250
    %1348 = vmatprep.subr.mxu0 0.0
    %1349 = vmatpush1.msra.mxu0 %v1251
    %1350 = vmatprep.subr.mxu0 0.0
    %1351 = vmatpush1.msra.mxu0 %v1252
    %1352 = vmatprep.subr.mxu0 0.0
    %1353 = vmatpush1.msra.mxu0 %v1253
    %1354 = vmatprep.subr.mxu0 0.0
    %1355 = vmatpush1.msra.mxu0 %v1254
    %1356 = vmatprep.subr.mxu0 0.0
    %1357 = vmatpush1.msra.mxu0 %v1255
    %1358 = vmatprep.subr.mxu0 0.0
    %1359 = vmatpush1.msra.mxu0 %v1256
    %1360 = vmatprep.subr.mxu0 0.0
    %1361 = vmatpush1.msra.mxu0 %v1257
    %1362 = vmatprep.subr.mxu0 0.0
    %1363 = vmatpush1.msra.mxu0 %v1258
    %1364 = vmatprep.mubr.f32.mxu0 %v1283
    %1365 = vmatmul.mubr.f32.gmra.mrb[0].mxu0 %v1282
    %v1366 = vpop.f32.mrb[0].mxu0
    %v1367 = vadd.f32 %v1280, %v1366
    %v1368 = vpop.f32.mrb[0].mxu0
    %1369 = vmatprep.mubr.f32.mxu0 %v1286
    %1370 = vmatmul.mubr.f32.gmra.mrb[0].mxu0 %v1285
    %v1371 = vpop.f32.mrb[0].mxu0
    %v1372 = vadd.f32 %v1280, %v1371
    %v1373 = vpop.f32.mrb[0].mxu0
    %1374 = vmatprep.mubr.f32.mxu0 %v1289
    %1375 = vmatmul.mubr.f32.gmra.mrb[0].mxu0 %v1288
    %v1376 = vpop.f32.mrb[0].mxu0
    %v1377 = vadd.f32 %v1280, %v1376
    %v1378 = vpop.f32.mrb[0].mxu0
    %1379 = vdwg.mxu0
    %1380 = vmatprep.subr.mxu0 0.0
    %1381 = vmatpush1.msra.mxu0 %v1259
    %1382 = vmatprep.subr.mxu0 0.0
    %1383 = vmatpush1.msra.mxu0 %v1260
    %1384 = vmatprep.subr.mxu0 0.0
    %1385 = vmatpush1.msra.mxu0 %v1261
    %1386 = vmatprep.subr.mxu0 0.0
    %1387 = vmatpush1.msra.mxu0 %v1262
    %1388 = vmatprep.subr.mxu0 0.0
    %1389 = vmatpush1.msra.mxu0 %v1263
    %1390 = vmatprep.subr.mxu0 0.0
    %1391 = vmatpush1.msra.mxu0 %v1264
    %1392 = vmatprep.subr.mxu0 0.0
    %1393 = vmatpush1.msra.mxu0 %v1265
    %1394 = vmatprep.subr.mxu0 0.0
    %1395 = vmatpush1.msra.mxu0 %v1266
    %1396 = vmatprep.subr.mxu0 0.0
    %1397 = vmatpush1.msra.mxu0 %v1267
    %1398 = vmatprep.subr.mxu0 0.0
    %1399 = vmatpush1.msra.mxu0 %v1268
    %1400 = vmatprep.subr.mxu0 0.0
    %1401 = vmatpush1.msra.mxu0 %v1269
    %1402 = vmatprep.subr.mxu0 0.0
    %1403 = vmatpush1.msra.mxu0 %v1270
    %1404 = vmatprep.subr.mxu0 0.0
    %1405 = vmatpush1.msra.mxu0 %v1271
    %1406 = vmatprep.subr.mxu0 0.0
    %1407 = vmatpush1.msra.mxu0 %v1272
    %1408 = vmatprep.subr.mxu0 0.0
    %1409 = vmatpush1.msra.mxu0 %v1273
    %1410 = vmatprep.subr.mxu0 0.0
    %1411 = vmatpush1.msra.mxu0 %v1274
    %1412 = vmatprep.subr.mxu0 0.0
    %1413 = vmatpush1.msra.mxu0 0.0
    %1414 = vmatprep.subr.mxu0 0.0
    %1415 = vmatpush1.msra.mxu0 0.0
    %1416 = vmatprep.subr.mxu0 0.0
    %1417 = vmatpush1.msra.mxu0 0.0
    %1418 = vmatprep.subr.mxu0 0.0
    %1419 = vmatpush1.msra.mxu0 0.0
    %1420 = vmatprep.subr.mxu0 0.0
    %1421 = vmatpush1.msra.mxu0 0.0
    %1422 = vmatprep.subr.mxu0 0.0
    %1423 = vmatpush1.msra.mxu0 0.0
    %1424 = vmatprep.subr.mxu0 0.0
    %1425 = vmatpush1.msra.mxu0 0.0
    %1426 = vmatprep.subr.mxu0 0.0
    %1427 = vmatpush1.msra.mxu0 0.0
    %1428 = vmatprep.subr.mxu0 0.0
    %1429 = vmatpush1.msra.mxu0 0.0
    %1430 = vmatprep.subr.mxu0 0.0
    %1431 = vmatpush1.msra.mxu0 0.0
    %1432 = vmatprep.subr.mxu0 0.0
    %1433 = vmatpush1.msra.mxu0 0.0
    %1434 = vmatprep.subr.mxu0 0.0
    %1435 = vmatpush1.msra.mxu0 0.0
    %1436 = vmatprep.subr.mxu0 0.0
    %1437 = vmatpush1.msra.mxu0 0.0
    %1438 = vmatprep.subr.mxu0 0.0
    %1439 = vmatpush1.msra.mxu0 0.0
    %1440 = vmatprep.subr.mxu0 0.0
    %1441 = vmatpush1.msra.mxu0 0.0
    %1442 = vmatprep.subr.mxu0 0.0
    %1443 = vmatpush1.msra.mxu0 0.0
    %1444 = vmatprep.mubr.f32.mxu0 0.0
    %1445 = vmatmul.mubr.f32.gmra.mrb[0].mxu0 %v1284
    %v1446 = vpop.f32.mrb[0].mxu0
    %v1447 = vadd.f32 %v1367, %v1446
    %v1448 = vpop.f32.mrb[0].mxu0
    %1449 = vmatprep.mubr.f32.mxu0 0.0
    %1450 = vmatmul.mubr.f32.gmra.mrb[0].mxu0 %v1287
    %v1451 = vpop.f32.mrb[0].mxu0
    %v1452 = vadd.f32 %v1372, %v1451
    %v1453 = vpop.f32.mrb[0].mxu0
    %1454 = vmatprep.mubr.f32.mxu0 0.0
    %1455 = vmatmul.mubr.f32.gmra.mrb[0].mxu0 %v1290
    %v1456 = vpop.f32.mrb[0].mxu0
    %v1457 = vadd.f32 %v1377, %v1456
    %v1458 = vpop.f32.mrb[0].mxu0
    %1459 = vdwg.mxu0
    %v1460 = vmax.f32 %v1447, 0.0
    %v1461 = vmax.f32 %v1452, 0.0
    %v1462 = vmax.f32 %v1457, 0.0
    %v1466 = vcombine.high %v1460, %v1460
    %v1467 = vcombine.high %v1461, %v1461
    %v1468 = vcombine.high %v1462, %v1462
    %v1469 = vcombine.low %v1460, %v1466
    %v1470 = vcombine.low %v1467, %v1462
    %v1471 = vrot.slane %v1469, 1
    %v1472 = vrot.slane %v1461, 1
    %v1473 = vsel %vm141, %v1471, %v1472
    %v1474 = vrot.slane %v1470, 1
    %v1475 = vrot.slane %v1468, 1
    %v1476 = vsel %vm141, %v1474, %v1475
    %v1477 = vrot.slane %v1469, 2
    %v1478 = vrot.slane %v1461, 2
    %v1479 = vsel %vm160, %v1477, %v1478
    %v1480 = vrot.slane %v1470, 2
    %v1481 = vrot.slane %v1468, 2
    %v1482 = vsel %vm160, %v1480, %v1481
    %v1483 = vcombine.low %v1469, %v1473
    %v1484 = vcombine.high %v1469, %v1473
    %v1485 = vcombine.high %v1479, %v1479
    %v1487 = vunpack.c.l.s4 1983009808
    %v1488 = vunpack.c.0.s8 %v1487
    %v1489 = vlaneseq
    %v1490 = vshrl.u32 %v1489, 7
    %v1491 = vsub.s32 %v1488, %v1490
    %v1492 = vrot.slane %v1483, %v1491
    %v1494 = vunpack.c.l.s4 1983009808
    %v1495 = vunpack.c.0.s8 %v1494
    %v1496 = vlaneseq
    %v1497 = vshrl.u32 %v1496, 7
    %v1498 = vsub.s32 %v1495, %v1497
    %v1499 = vrot.slane %v1484, %v1498
    %v1501 = vunpack.c.l.s4 1983009808
    %v1502 = vunpack.c.0.s8 %v1501
    %v1503 = vlaneseq
    %v1504 = vshrl.u32 %v1503, 7
    %v1505 = vsub.s32 %v1502, %v1504
    %v1506 = vrot.slane %v1479, %v1505
    %v1508 = vunpack.c.l.s4 1983009808
    %v1509 = vunpack.c.0.s8 %v1508
    %v1510 = vlaneseq
    %v1511 = vshrl.u32 %v1510, 7
    %v1512 = vsub.s32 %v1509, %v1511
    %v1513 = vrot.slane %v1485, %v1512
    %v1514 = vcombine.low %v1492, %v1506
    %v1515 = vcombine.high %v1492, %v1506
    %v1516 = vcombine.low %v1499, %v1513
    %v1517 = vcombine.high %v1499, %v1513
    %v1518 = vcombine.low %v1461, %v1472
    %v1520 = vunpack.c.l.s4 1983009808
    %v1521 = vunpack.c.0.s8 %v1520
    %v1522 = vlaneseq
    %v1523 = vshrl.u32 %v1522, 7
    %v1524 = vsub.s32 %v1521, %v1523
    %v1525 = vrot.slane %v1518, %v1524
    %v1527 = vunpack.c.l.s4 1983009808
    %v1528 = vunpack.c.0.s8 %v1527
    %v1529 = vlaneseq
    %v1530 = vshrl.u32 %v1529, 7
    %v1531 = vsub.s32 %v1528, %v1530
    %v1532 = vrot.slane %v1478, %v1531
    %v1533 = vcombine.low %v1525, %v1532
    %v1534 = vcombine.low %v1470, %v1476
    %v1535 = vcombine.high %v1470, %v1476
    %v1536 = vcombine.high %v1482, %v1482
    %v1538 = vunpack.c.l.s4 1983009808
    %v1539 = vunpack.c.0.s8 %v1538
    %v1540 = vlaneseq
    %v1541 = vshrl.u32 %v1540, 7
    %v1542 = vsub.s32 %v1539, %v1541
    %v1543 = vrot.slane %v1534, %v1542
    %v1545 = vunpack.c.l.s4 1983009808
    %v1546 = vunpack.c.0.s8 %v1545
    %v1547 = vlaneseq
    %v1548 = vshrl.u32 %v1547, 7
    %v1549 = vsub.s32 %v1546, %v1548
    %v1550 = vrot.slane %v1535, %v1549
    %v1552 = vunpack.c.l.s4 1983009808
    %v1553 = vunpack.c.0.s8 %v1552
    %v1554 = vlaneseq
    %v1555 = vshrl.u32 %v1554, 7
    %v1556 = vsub.s32 %v1553, %v1555
    %v1557 = vrot.slane %v1482, %v1556
    %v1559 = vunpack.c.l.s4 1983009808
    %v1560 = vunpack.c.0.s8 %v1559
    %v1561 = vlaneseq
    %v1562 = vshrl.u32 %v1561, 7
    %v1563 = vsub.s32 %v1560, %v1562
    %v1564 = vrot.slane %v1536, %v1563
    %v1565 = vcombine.low %v1543, %v1557
    %v1566 = vcombine.high %v1543, %v1557
    %v1567 = vcombine.low %v1550, %v1564
    %v1568 = vcombine.high %v1550, %v1564
    %v1569 = vcombine.low %v1468, %v1475
    %v1571 = vunpack.c.l.s4 1983009808
    %v1572 = vunpack.c.0.s8 %v1571
    %v1573 = vlaneseq
    %v1574 = vshrl.u32 %v1573, 7
    %v1575 = vsub.s32 %v1572, %v1574
    %v1576 = vrot.slane %v1569, %v1575
    %v1578 = vunpack.c.l.s4 1983009808
    %v1579 = vunpack.c.0.s8 %v1578
    %v1580 = vlaneseq
    %v1581 = vshrl.u32 %v1580, 7
    %v1582 = vsub.s32 %v1579, %v1581
    %v1583 = vrot.slane %v1481, %v1582
    %v1584 = vcombine.low %v1576, %v1583
    %v1585 = vld [vmem:[#allocation8] sm:$0xff]
    %v1586 = vld [vmem:[#allocation8 + $0x8] sm:$0xff]
    %v1587 = vld [vmem:[#allocation8 + $0x10] sm:$0xff]
    %v1588 = vld [vmem:[#allocation8 + $0x18] sm:$0xff]
    %v1589 = vld [vmem:[#allocation8 + $0x20] sm:$0xff]
    %v1590 = vld [vmem:[#allocation8 + $0x28] sm:$0xff]
    %v1591 = vld [vmem:[#allocation8 + $0x30] sm:$0xff]
    %v1592 = vld [vmem:[#allocation8 + $0x38] sm:$0xff]
    %v1593 = vld [vmem:[#allocation8 + $0x40] sm:$0xff]
    %v1594 = vld [vmem:[#allocation8 + $0x48] sm:$0xff]
    %v1595 = vld [vmem:[#allocation8 + $0x50] sm:$0xff]
    %v1596 = vld [vmem:[#allocation8 + $0x58] sm:$0xff]
    %v1597 = vld [vmem:[#allocation8 + $0x60] sm:$0xff]
    %v1598 = vld [vmem:[#allocation8 + $0x68] sm:$0xff]
    %v1599 = vld [vmem:[#allocation8 + $0x70] sm:$0xff]
    %v1600 = vld [vmem:[#allocation8 + $0x78] sm:$0xff]
    %v1601 = vld [vmem:[#allocation8 + $0x80] sm:$0xff]
    %v1602 = vld [vmem:[#allocation8 + $0x88] sm:$0xff]
    %v1603 = vld [vmem:[#allocation8 + $0x90] sm:$0xff]
    %v1604 = vld [vmem:[#allocation8 + $0x98] sm:$0xff]
    %v1605 = vld [vmem:[#allocation8 + $0xa0] sm:$0xff]
    %v1606 = vld [vmem:[#allocation8 + $0xa8] sm:$0xff]
    %v1607 = vld [vmem:[#allocation8 + $0xb0] sm:$0xff]
    %v1608 = vld [vmem:[#allocation8 + $0xb8] sm:$0xff]
    %v1609 = vld [vmem:[#allocation8 + $0xc0] sm:$0xff]
    %v1610 = vld [vmem:[#allocation8 + $0xc8] sm:$0xff]
    %v1611 = vld [vmem:[#allocation8 + $0xd0] sm:$0xff]
    %v1612 = vld [vmem:[#allocation8 + $0xd8] sm:$0xff]
    %v1613 = vld [vmem:[#allocation8 + $0xe0] sm:$0xff]
    %v1614 = vld [vmem:[#allocation8 + $0xe8] sm:$0xff]
    %v1615 = vld [vmem:[#allocation8 + $0xf0] sm:$0xff]
    %v1616 = vld [vmem:[#allocation8 + $0xf8] sm:$0xff]
    %v1617 = vld [vmem:[#allocation8 + $0x100] sm:$0xff]
    %v1618 = vld [vmem:[#allocation8 + $0x108] sm:$0xff]
    %v1619 = vld [vmem:[#allocation8 + $0x110] sm:$0xff]
    %v1620 = vld [vmem:[#allocation8 + $0x118] sm:$0xff]
    %v1621 = vld [vmem:[#allocation8 + $0x120] sm:$0xff]
    %v1622 = vld [vmem:[#allocation8 + $0x128] sm:$0xff]
    %v1623 = vld [vmem:[#allocation8 + $0x130] sm:$0xff]
    %v1624 = vld [vmem:[#allocation8 + $0x138] sm:$0xff]
    %v1625 = vld [vmem:[#allocation8 + $0x140] sm:$0xff]
    %v1626 = vld [vmem:[#allocation8 + $0x148] sm:$0xff]
    %v1627 = vld [vmem:[#allocation8 + $0x150] sm:$0xff]
    %v1628 = vld [vmem:[#allocation8 + $0x158] sm:$0xff]
    %v1629 = vld [vmem:[#allocation8 + $0x160] sm:$0xff]
    %v1630 = vld [vmem:[#allocation8 + $0x168] sm:$0xff]
    %v1631 = vld [vmem:[#allocation8 + $0x170] sm:$0xff]
    %v1632 = vld [vmem:[#allocation8 + $0x178] sm:$0xff]
    %v1633 = vld [vmem:[%s8] sm:$0x1]
    %v1635 = vlaneseq
    %v1636 = vshrl.u32 %v1635, 7
    %v1637 = vsub.s32 0, %v1636
    %v1638 = vrot.slane %v1633, %v1637
    %v1640 = vcombine.low %v1514, %v1515
    %v1641 = vcombine.high %v1514, %v1515
    %v1642 = vcombine.low %v1516, %v1517
    %v1643 = vcombine.high %v1516, %v1517
    %v1645 = vunpack.c.l.s4 1983009808
    %v1646 = vunpack.c.0.s8 %v1645
    %v1647 = vlaneseq
    %v1648 = vshrl.u32 %v1647, 7
    %v1649 = vsub.s32 %v1646, %v1648
    %v1650 = vrot.slane %v1640, %v1649
    %v1652 = vunpack.c.l.s4 1983009808
    %v1653 = vunpack.c.0.s8 %v1652
    %v1654 = vlaneseq
    %v1655 = vshrl.u32 %v1654, 7
    %v1656 = vsub.s32 %v1653, %v1655
    %v1657 = vrot.slane %v1641, %v1656
    %v1659 = vunpack.c.l.s4 1983009808
    %v1660 = vunpack.c.0.s8 %v1659
    %v1661 = vlaneseq
    %v1662 = vshrl.u32 %v1661, 7
    %v1663 = vsub.s32 %v1660, %v1662
    %v1664 = vrot.slane %v1642, %v1663
    %v1666 = vunpack.c.l.s4 1983009808
    %v1667 = vunpack.c.0.s8 %v1666
    %v1668 = vlaneseq
    %v1669 = vshrl.u32 %v1668, 7
    %v1670 = vsub.s32 %v1667, %v1669
    %v1671 = vrot.slane %v1643, %v1670
    %v1672 = vcombine.low %v1650, %v1664
    %v1673 = vcombine.high %v1650, %v1664
    %v1674 = vcombine.low %v1657, %v1671
    %v1675 = vcombine.low %v1533, %v1565
    %v1676 = vcombine.high %v1533, %v1565
    %v1677 = vcombine.low %v1566, %v1567
    %v1678 = vcombine.high %v1566, %v1567
    %v1680 = vunpack.c.l.s4 1983009808
    %v1681 = vunpack.c.0.s8 %v1680
    %v1682 = vlaneseq
    %v1683 = vshrl.u32 %v1682, 7
    %v1684 = vsub.s32 %v1681, %v1683
    %v1685 = vrot.slane %v1675, %v1684
    %v1687 = vunpack.c.l.s4 1983009808
    %v1688 = vunpack.c.0.s8 %v1687
    %v1689 = vlaneseq
    %v1690 = vshrl.u32 %v1689, 7
    %v1691 = vsub.s32 %v1688, %v1690
    %v1692 = vrot.slane %v1676, %v1691
    %v1694 = vunpack.c.l.s4 1983009808
    %v1695 = vunpack.c.0.s8 %v1694
    %v1696 = vlaneseq
    %v1697 = vshrl.u32 %v1696, 7
    %v1698 = vsub.s32 %v1695, %v1697
    %v1699 = vrot.slane %v1677, %v1698
    %v1701 = vunpack.c.l.s4 1983009808
    %v1702 = vunpack.c.0.s8 %v1701
    %v1703 = vlaneseq
    %v1704 = vshrl.u32 %v1703, 7
    %v1705 = vsub.s32 %v1702, %v1704
    %v1706 = vrot.slane %v1678, %v1705
    %v1707 = vcombine.low %v1685, %v1699
    %v1708 = vcombine.high %v1685, %v1699
    %v1709 = vcombine.low %v1692, %v1706
    %v1710 = vcombine.low %v1568, %v1584
    %v1711 = vcombine.high %v1568, %v1584
    %v1713 = vunpack.c.l.s4 1983009808
    %v1714 = vunpack.c.0.s8 %v1713
    %v1715 = vlaneseq
    %v1716 = vshrl.u32 %v1715, 7
    %v1717 = vsub.s32 %v1714, %v1716
    %v1718 = vrot.slane %v1710, %v1717
    %v1720 = vunpack.c.l.s4 1983009808
    %v1721 = vunpack.c.0.s8 %v1720
    %v1722 = vlaneseq
    %v1723 = vshrl.u32 %v1722, 7
    %v1724 = vsub.s32 %v1721, %v1723
    %v1725 = vrot.slane %v1711, %v1724
    %v1726 = vcombine.high %v1718, %v1718
    %1736 = vmatprep.subr.mxu0 0.0
    %1737 = vmatpush1.msra.mxu0 %v1585
    %1738 = vmatprep.subr.mxu0 0.0
    %1739 = vmatpush1.msra.mxu0 %v1586
    %1740 = vmatprep.subr.mxu0 0.0
    %1741 = vmatpush1.msra.mxu0 %v1587
    %1742 = vmatprep.subr.mxu0 0.0
    %1743 = vmatpush1.msra.mxu0 %v1588
    %1744 = vmatprep.subr.mxu0 0.0
    %1745 = vmatpush1.msra.mxu0 %v1589
    %1746 = vmatprep.subr.mxu0 0.0
    %1747 = vmatpush1.msra.mxu0 %v1590
    %1748 = vmatprep.subr.mxu0 0.0
    %1749 = vmatpush1.msra.mxu0 %v1591
    %1750 = vmatprep.subr.mxu0 0.0
    %1751 = vmatpush1.msra.mxu0 %v1592
    %1752 = vmatprep.subr.mxu0 0.0
    %1753 = vmatpush1.msra.mxu0 %v1593
    %1754 = vmatprep.subr.mxu0 0.0
    %1755 = vmatpush1.msra.mxu0 %v1594
    %1756 = vmatprep.subr.mxu0 0.0
    %1757 = vmatpush1.msra.mxu0 %v1595
    %1758 = vmatprep.subr.mxu0 0.0
    %1759 = vmatpush1.msra.mxu0 %v1596
    %1760 = vmatprep.subr.mxu0 0.0
    %1761 = vmatpush1.msra.mxu0 %v1597
    %1762 = vmatprep.subr.mxu0 0.0
    %1763 = vmatpush1.msra.mxu0 %v1598
    %1764 = vmatprep.subr.mxu0 0.0
    %1765 = vmatpush1.msra.mxu0 %v1599
    %1766 = vmatprep.subr.mxu0 0.0
    %1767 = vmatpush1.msra.mxu0 %v1600
    %1768 = vmatprep.subr.mxu0 0.0
    %1769 = vmatpush1.msra.mxu0 %v1601
    %1770 = vmatprep.subr.mxu0 0.0
    %1771 = vmatpush1.msra.mxu0 %v1602
    %1772 = vmatprep.subr.mxu0 0.0
    %1773 = vmatpush1.msra.mxu0 %v1603
    %1774 = vmatprep.subr.mxu0 0.0
    %1775 = vmatpush1.msra.mxu0 %v1604
    %1776 = vmatprep.subr.mxu0 0.0
    %1777 = vmatpush1.msra.mxu0 %v1605
    %1778 = vmatprep.subr.mxu0 0.0
    %1779 = vmatpush1.msra.mxu0 %v1606
    %1780 = vmatprep.subr.mxu0 0.0
    %1781 = vmatpush1.msra.mxu0 %v1607
    %1782 = vmatprep.subr.mxu0 0.0
    %1783 = vmatpush1.msra.mxu0 %v1608
    %1784 = vmatprep.subr.mxu0 0.0
    %1785 = vmatpush1.msra.mxu0 %v1609
    %1786 = vmatprep.subr.mxu0 0.0
    %1787 = vmatpush1.msra.mxu0 %v1610
    %1788 = vmatprep.subr.mxu0 0.0
    %1789 = vmatpush1.msra.mxu0 %v1611
    %1790 = vmatprep.subr.mxu0 0.0
    %1791 = vmatpush1.msra.mxu0 %v1612
    %1792 = vmatprep.subr.mxu0 0.0
    %1793 = vmatpush1.msra.mxu0 %v1613
    %1794 = vmatprep.subr.mxu0 0.0
    %1795 = vmatpush1.msra.mxu0 %v1614
    %1796 = vmatprep.subr.mxu0 0.0
    %1797 = vmatpush1.msra.mxu0 %v1615
    %1798 = vmatprep.subr.mxu0 0.0
    %1799 = vmatpush1.msra.mxu0 %v1616
    %1800 = vmatprep.mubr.f32.mxu0 %v1673
    %1801 = vmatmul.mubr.f32.gmra.mrb[0].mxu0 %v1672
    %v1802 = vpop.f32.mrb[0].mxu0
    %v1803 = vadd.f32 %v1638, %v1802
    %v1804 = vpop.f32.mrb[0].mxu0
    %1805 = vmatprep.mubr.f32.mxu0 %v1708
    %1806 = vmatmul.mubr.f32.gmra.mrb[0].mxu0 %v1707
    %v1807 = vpop.f32.mrb[0].mxu0
    %v1808 = vadd.f32 %v1638, %v1807
    %v1809 = vpop.f32.mrb[0].mxu0
    %1810 = vmatprep.mubr.f32.mxu0 %v1726
    %1811 = vmatmul.mubr.f32.gmra.mrb[0].mxu0 %v1718
    %v1812 = vpop.f32.mrb[0].mxu0
    %v1813 = vadd.f32 %v1638, %v1812
    %v1814 = vpop.f32.mrb[0].mxu0
    %1815 = vdwg.mxu0
    %1816 = vmatprep.subr.mxu0 0.0
    %1817 = vmatpush1.msra.mxu0 %v1617
    %1818 = vmatprep.subr.mxu0 0.0
    %1819 = vmatpush1.msra.mxu0 %v1618
    %1820 = vmatprep.subr.mxu0 0.0
    %1821 = vmatpush1.msra.mxu0 %v1619
    %1822 = vmatprep.subr.mxu0 0.0
    %1823 = vmatpush1.msra.mxu0 %v1620
    %1824 = vmatprep.subr.mxu0 0.0
    %1825 = vmatpush1.msra.mxu0 %v1621
    %1826 = vmatprep.subr.mxu0 0.0
    %1827 = vmatpush1.msra.mxu0 %v1622
    %1828 = vmatprep.subr.mxu0 0.0
    %1829 = vmatpush1.msra.mxu0 %v1623
    %1830 = vmatprep.subr.mxu0 0.0
    %1831 = vmatpush1.msra.mxu0 %v1624
    %1832 = vmatprep.subr.mxu0 0.0
    %1833 = vmatpush1.msra.mxu0 %v1625
    %1834 = vmatprep.subr.mxu0 0.0
    %1835 = vmatpush1.msra.mxu0 %v1626
    %1836 = vmatprep.subr.mxu0 0.0
    %1837 = vmatpush1.msra.mxu0 %v1627
    %1838 = vmatprep.subr.mxu0 0.0
    %1839 = vmatpush1.msra.mxu0 %v1628
    %1840 = vmatprep.subr.mxu0 0.0
    %1841 = vmatpush1.msra.mxu0 %v1629
    %1842 = vmatprep.subr.mxu0 0.0
    %1843 = vmatpush1.msra.mxu0 %v1630
    %1844 = vmatprep.subr.mxu0 0.0
    %1845 = vmatpush1.msra.mxu0 %v1631
    %1846 = vmatprep.subr.mxu0 0.0
    %1847 = vmatpush1.msra.mxu0 %v1632
    %1848 = vmatprep.subr.mxu0 0.0
    %1849 = vmatpush1.msra.mxu0 0.0
    %1850 = vmatprep.subr.mxu0 0.0
    %1851 = vmatpush1.msra.mxu0 0.0
    %1852 = vmatprep.subr.mxu0 0.0
    %1853 = vmatpush1.msra.mxu0 0.0
    %1854 = vmatprep.subr.mxu0 0.0
    %1855 = vmatpush1.msra.mxu0 0.0
    %1856 = vmatprep.subr.mxu0 0.0
    %1857 = vmatpush1.msra.mxu0 0.0
    %1858 = vmatprep.subr.mxu0 0.0
    %1859 = vmatpush1.msra.mxu0 0.0
    %1860 = vmatprep.subr.mxu0 0.0
    %1861 = vmatpush1.msra.mxu0 0.0
    %1862 = vmatprep.subr.mxu0 0.0
    %1863 = vmatpush1.msra.mxu0 0.0
    %1864 = vmatprep.subr.mxu0 0.0
    %1865 = vmatpush1.msra.mxu0 0.0
    %1866 = vmatprep.subr.mxu0 0.0
    %1867 = vmatpush1.msra.mxu0 0.0
    %1868 = vmatprep.subr.mxu0 0.0
    %1869 = vmatpush1.msra.mxu0 0.0
    %1870 = vmatprep.subr.mxu0 0.0
    %1871 = vmatpush1.msra.mxu0 0.0
    %1872 = vmatprep.subr.mxu0 0.0
    %1873 = vmatpush1.msra.mxu0 0.0
    %1874 = vmatprep.subr.mxu0 0.0
    %1875 = vmatpush1.msra.mxu0 0.0
    %1876 = vmatprep.subr.mxu0 0.0
    %1877 = vmatpush1.msra.mxu0 0.0
    %1878 = vmatprep.subr.mxu0 0.0
    %1879 = vmatpush1.msra.mxu0 0.0
    %1880 = vmatprep.mubr.f32.mxu0 0.0
    %1881 = vmatmul.mubr.f32.gmra.mrb[0].mxu0 %v1674
    %v1882 = vpop.f32.mrb[0].mxu0
    %v1883 = vadd.f32 %v1803, %v1882
    %v1884 = vpop.f32.mrb[0].mxu0
    %1885 = vmatprep.mubr.f32.mxu0 0.0
    %1886 = vmatmul.mubr.f32.gmra.mrb[0].mxu0 %v1709
    %v1887 = vpop.f32.mrb[0].mxu0
    %v1888 = vadd.f32 %v1808, %v1887
    %v1889 = vpop.f32.mrb[0].mxu0
    %1890 = vmatprep.mubr.f32.mxu0 0.0
    %1891 = vmatmul.mubr.f32.gmra.mrb[0].mxu0 %v1725
    %v1892 = vpop.f32.mrb[0].mxu0
    %v1893 = vadd.f32 %v1813, %v1892
    %v1894 = vpop.f32.mrb[0].mxu0
    %1895 = vdwg.mxu0
    %v1896 = vmax.f32 %v1883, 0.0
    %v1897 = vmax.f32 %v1888, 0.0
    %v1898 = vmax.f32 %v1893, 0.0
    %v1902 = vcombine.high %v1896, %v1896
    %v1904 = vunpack.c.l.s4 1983009808
    %v1905 = vunpack.c.0.s8 %v1904
    %v1906 = vlaneseq
    %v1907 = vshrl.u32 %v1906, 7
    %v1908 = vsub.s32 %v1905, %v1907
    %v1909 = vrot.slane %v1896, %v1908
    %v1911 = vunpack.c.l.s4 1983009808
    %v1912 = vunpack.c.0.s8 %v1911
    %v1913 = vlaneseq
    %v1914 = vshrl.u32 %v1913, 7
    %v1915 = vsub.s32 %v1912, %v1914
    %v1916 = vrot.slane %v1902, %v1915
    %v1917 = vcombine.high %v1909, %v1909
    %v1918 = vcombine.high %v1916, %v1916
    %v1919 = vcombine.high %v1897, %v1897
    %v1921 = vunpack.c.l.s4 1983009808
    %v1922 = vunpack.c.0.s8 %v1921
    %v1923 = vlaneseq
    %v1924 = vshrl.u32 %v1923, 7
    %v1925 = vsub.s32 %v1922, %v1924
    %v1926 = vrot.slane %v1897, %v1925
    %v1928 = vunpack.c.l.s4 1983009808
    %v1929 = vunpack.c.0.s8 %v1928
    %v1930 = vlaneseq
    %v1931 = vshrl.u32 %v1930, 7
    %v1932 = vsub.s32 %v1929, %v1931
    %v1933 = vrot.slane %v1919, %v1932
    %v1934 = vcombine.high %v1926, %v1926
    %v1935 = vcombine.high %v1933, %v1933
    %v1937 = vunpack.c.l.s4 1983009808
    %v1938 = vunpack.c.0.s8 %v1937
    %v1939 = vlaneseq
    %v1940 = vshrl.u32 %v1939, 7
    %v1941 = vsub.s32 %v1938, %v1940
    %v1942 = vrot.slane %v1898, %v1941
    %v1943 = vcombine.high %v1942, %v1942
    %v1944 = vcombine.low %v1909, %v1917
    %v1945 = vcombine.low %v1916, %v1918
    %v1947 = vunpack.c.l.s4 1983009808
    %v1948 = vunpack.c.0.s8 %v1947
    %v1949 = vlaneseq
    %v1950 = vshrl.u32 %v1949, 7
    %v1951 = vsub.s32 %v1948, %v1950
    %v1952 = vrot.slane %v1944, %v1951
    %v1954 = vunpack.c.l.s4 1983009808
    %v1955 = vunpack.c.0.s8 %v1954
    %v1956 = vlaneseq
    %v1957 = vshrl.u32 %v1956, 7
    %v1958 = vsub.s32 %v1955, %v1957
    %v1959 = vrot.slane %v1945, %v1958
    %v1960 = vcombine.low %v1952, %v1959
    %v1962 = vunpack.c.l.s4 1983009808
    %v1963 = vunpack.c.0.s8 %v1962
    %v1964 = vlaneseq
    %v1965 = vshrl.u32 %v1964, 7
    %v1966 = vsub.s32 %v1963, %v1965
    %v1967 = vrot.slane %v1926, %v1966
    %v1968 = vcombine.low %v1934, %v1933
    %v1969 = vcombine.low %v1935, %v1942
    %v1971 = vunpack.c.l.s4 1983009808
    %v1972 = vunpack.c.0.s8 %v1971
    %v1973 = vlaneseq
    %v1974 = vshrl.u32 %v1973, 7
    %v1975 = vsub.s32 %v1972, %v1974
    %v1976 = vrot.slane %v1968, %v1975
    %v1978 = vunpack.c.l.s4 1983009808
    %v1979 = vunpack.c.0.s8 %v1978
    %v1980 = vlaneseq
    %v1981 = vshrl.u32 %v1980, 7
    %v1982 = vsub.s32 %v1979, %v1981
    %v1983 = vrot.slane %v1969, %v1982
    %v1984 = vcombine.low %v1976, %v1983
    %v1986 = vunpack.c.l.s4 1983009808
    %v1987 = vunpack.c.0.s8 %v1986
    %v1988 = vlaneseq
    %v1989 = vshrl.u32 %v1988, 7
    %v1990 = vsub.s32 %v1987, %v1989
    %v1991 = vrot.slane %v1943, %v1990
    %vm1996 = vcmask 1041408
    %v1997 = vsel %vm1996, %v1967, -inf
    %v1998 = vmax.f32 %v1960, %v1997
    %v1999 = vrot.slane %v1998, 4
    %v2000 = vmax.f32 %v1998, %v1999
    %v2001 = vrot.slane %v2000, 2
    %v2002 = vmax.f32 %v2000, %v2001
    %v2003 = vrot.slane %v2002, 1
    %v2004 = vmax.f32 %v2002, %v2003
    %v2005 = vsel %vm1996, %v1991, -inf
    %v2006 = vmax.f32 %v1984, %v2005
    %v2007 = vrot.slane %v2006, 4
    %v2008 = vmax.f32 %v2006, %v2007
    %v2009 = vrot.slane %v2008, 2
    %v2010 = vmax.f32 %v2008, %v2009
    %v2011 = vrot.slane %v2010, 1
    %v2012 = vmax.f32 %v2010, %v2011
    %vm2015 = vcmask 1041409
    %v2016 = vsel %vm2015, %v758, %v750
    %v2020 = vsel %vm2015, %v1094, %v1086
    %v2024 = vsel %vm2015, %v2012, %v2004
    %v2026 = vld [vmem:[#allocation10] sm:$0xff]
    %v2027 = vld [vmem:[#allocation10 + $0x8] sm:$0xff]
    %v2028 = vld [vmem:[#allocation10 + $0x10] sm:$0xff]
    %v2029 = vld [vmem:[#allocation10 + $0x18] sm:$0xff]
    %v2030 = vld [vmem:[#allocation10 + $0x20] sm:$0xff]
    %v2031 = vld [vmem:[#allocation10 + $0x28] sm:$0xff]
    %v2032 = vld [vmem:[#allocation10 + $0x30] sm:$0xff]
    %v2033 = vld [vmem:[#allocation10 + $0x38] sm:$0xff]
    %v2034 = vld [vmem:[#allocation10 + $0x40] sm:$0xff]
    %v2035 = vld [vmem:[#allocation10 + $0x48] sm:$0xff]
    %v2036 = vld [vmem:[#allocation10 + $0x50] sm:$0xff]
    %v2037 = vld [vmem:[#allocation10 + $0x58] sm:$0xff]
    %v2038 = vld [vmem:[#allocation10 + $0x60] sm:$0xff]
    %v2039 = vld [vmem:[#allocation10 + $0x68] sm:$0xff]
    %v2040 = vld [vmem:[#allocation10 + $0x70] sm:$0xff]
    %v2041 = vld [vmem:[#allocation10 + $0x78] sm:$0xff]
    %v2042 = vld [vmem:[#allocation10 + $0x80] sm:$0xff]
    %v2043 = vld [vmem:[#allocation10 + $0x88] sm:$0xff]
    %v2044 = vld [vmem:[#allocation10 + $0x90] sm:$0xff]
    %v2045 = vld [vmem:[#allocation10 + $0x98] sm:$0xff]
    %v2046 = vld [vmem:[#allocation10 + $0xa0] sm:$0xff]
    %v2047 = vld [vmem:[#allocation10 + $0xa8] sm:$0xff]
    %v2048 = vld [vmem:[#allocation10 + $0xb0] sm:$0xff]
    %v2049 = vld [vmem:[#allocation10 + $0xb8] sm:$0xff]
    %v2050 = vld [vmem:[#allocation10 + $0xc0] sm:$0xff]
    %v2051 = vld [vmem:[#allocation10 + $0xc8] sm:$0xff]
    %v2052 = vld [vmem:[#allocation10 + $0xd0] sm:$0xff]
    %v2053 = vld [vmem:[#allocation10 + $0xd8] sm:$0xff]
    %v2054 = vld [vmem:[#allocation10 + $0xe0] sm:$0xff]
    %v2055 = vld [vmem:[#allocation10 + $0xe8] sm:$0xff]
    %v2056 = vld [vmem:[#allocation10 + $0xf0] sm:$0xff]
    %v2057 = vld [vmem:[#allocation10 + $0xf8] sm:$0xff]
    %v2058 = vld [vmem:[#allocation10 + $0x100] sm:$0xff]
    %v2059 = vld [vmem:[#allocation10 + $0x108] sm:$0xff]
    %v2060 = vld [vmem:[#allocation10 + $0x110] sm:$0xff]
    %v2061 = vld [vmem:[#allocation10 + $0x118] sm:$0xff]
    %v2062 = vld [vmem:[#allocation10 + $0x120] sm:$0xff]
    %v2063 = vld [vmem:[#allocation10 + $0x128] sm:$0xff]
    %v2064 = vld [vmem:[#allocation10 + $0x130] sm:$0xff]
    %v2065 = vld [vmem:[#allocation10 + $0x138] sm:$0xff]
    %v2066 = vld [vmem:[#allocation10 + $0x140] sm:$0xff]
    %v2067 = vld [vmem:[#allocation10 + $0x148] sm:$0xff]
    %v2068 = vld [vmem:[#allocation10 + $0x150] sm:$0xff]
    %v2069 = vld [vmem:[#allocation10 + $0x158] sm:$0xff]
    %v2070 = vld [vmem:[#allocation10 + $0x160] sm:$0xff]
    %v2071 = vld [vmem:[#allocation10 + $0x168] sm:$0xff]
    %v2072 = vld [vmem:[#allocation10 + $0x170] sm:$0xff]
    %v2073 = vld [vmem:[#allocation10 + $0x178] sm:$0xff]
    %v2074 = vld [vmem:[%s10] sm:$0x1]
    %v2076 = vlaneseq
    %v2077 = vshrl.u32 %v2076, 7
    %v2078 = vsub.s32 0, %v2077
    %v2079 = vrot.slane %v2074, %v2078
    %2081 = vmatprep.subr.mxu0 0.0
    %2082 = vmatpush1.msra.mxu0 %v2026
    %2083 = vmatprep.subr.mxu0 0.0
    %2084 = vmatpush1.msra.mxu0 %v2027
    %2085 = vmatprep.subr.mxu0 0.0
    %2086 = vmatpush1.msra.mxu0 %v2028
    %2087 = vmatprep.subr.mxu0 0.0
    %2088 = vmatpush1.msra.mxu0 %v2029
    %2089 = vmatprep.subr.mxu0 0.0
    %2090 = vmatpush1.msra.mxu0 %v2030
    %2091 = vmatprep.subr.mxu0 0.0
    %2092 = vmatpush1.msra.mxu0 %v2031
    %2093 = vmatprep.subr.mxu0 0.0
    %2094 = vmatpush1.msra.mxu0 %v2032
    %2095 = vmatprep.subr.mxu0 0.0
    %2096 = vmatpush1.msra.mxu0 %v2033
    %2097 = vmatprep.subr.mxu0 0.0
    %2098 = vmatpush1.msra.mxu0 %v2034
    %2099 = vmatprep.subr.mxu0 0.0
    %2100 = vmatpush1.msra.mxu0 %v2035
    %2101 = vmatprep.subr.mxu0 0.0
    %2102 = vmatpush1.msra.mxu0 %v2036
    %2103 = vmatprep.subr.mxu0 0.0
    %2104 = vmatpush1.msra.mxu0 %v2037
    %2105 = vmatprep.subr.mxu0 0.0
    %2106 = vmatpush1.msra.mxu0 %v2038
    %2107 = vmatprep.subr.mxu0 0.0
    %2108 = vmatpush1.msra.mxu0 %v2039
    %2109 = vmatprep.subr.mxu0 0.0
    %2110 = vmatpush1.msra.mxu0 %v2040
    %2111 = vmatprep.subr.mxu0 0.0
    %2112 = vmatpush1.msra.mxu0 %v2041
    %2113 = vmatprep.subr.mxu0 0.0
    %2114 = vmatpush1.msra.mxu0 %v2042
    %2115 = vmatprep.subr.mxu0 0.0
    %2116 = vmatpush1.msra.mxu0 %v2043
    %2117 = vmatprep.subr.mxu0 0.0
    %2118 = vmatpush1.msra.mxu0 %v2044
    %2119 = vmatprep.subr.mxu0 0.0
    %2120 = vmatpush1.msra.mxu0 %v2045
    %2121 = vmatprep.subr.mxu0 0.0
    %2122 = vmatpush1.msra.mxu0 %v2046
    %2123 = vmatprep.subr.mxu0 0.0
    %2124 = vmatpush1.msra.mxu0 %v2047
    %2125 = vmatprep.subr.mxu0 0.0
    %2126 = vmatpush1.msra.mxu0 %v2048
    %2127 = vmatprep.subr.mxu0 0.0
    %2128 = vmatpush1.msra.mxu0 %v2049
    %2129 = vmatprep.subr.mxu0 0.0
    %2130 = vmatpush1.msra.mxu0 %v2050
    %2131 = vmatprep.subr.mxu0 0.0
    %2132 = vmatpush1.msra.mxu0 %v2051
    %2133 = vmatprep.subr.mxu0 0.0
    %2134 = vmatpush1.msra.mxu0 %v2052
    %2135 = vmatprep.subr.mxu0 0.0
    %2136 = vmatpush1.msra.mxu0 %v2053
    %2137 = vmatprep.subr.mxu0 0.0
    %2138 = vmatpush1.msra.mxu0 %v2054
    %2139 = vmatprep.subr.mxu0 0.0
    %2140 = vmatpush1.msra.mxu0 %v2055
    %2141 = vmatprep.subr.mxu0 0.0
    %2142 = vmatpush1.msra.mxu0 %v2056
    %2143 = vmatprep.subr.mxu0 0.0
    %2144 = vmatpush1.msra.mxu0 %v2057
    %2145 = vmatprep.mubr.f32.mxu0 %v2020
    %2146 = vmatmul.mubr.f32.gmra.mrb[0].mxu0 %v2016
    %v2147 = vpop.f32.mrb[0].mxu0
    %v2148 = vadd.f32 %v2079, %v2147
    %v2149 = vpop.f32.mrb[0].mxu0
    %2150 = vdwg.mxu0
    %2151 = vmatprep.subr.mxu0 0.0
    %2152 = vmatpush1.msra.mxu0 %v2058
    %2153 = vmatprep.subr.mxu0 0.0
    %2154 = vmatpush1.msra.mxu0 %v2059
    %2155 = vmatprep.subr.mxu0 0.0
    %2156 = vmatpush1.msra.mxu0 %v2060
    %2157 = vmatprep.subr.mxu0 0.0
    %2158 = vmatpush1.msra.mxu0 %v2061
    %2159 = vmatprep.subr.mxu0 0.0
    %2160 = vmatpush1.msra.mxu0 %v2062
    %2161 = vmatprep.subr.mxu0 0.0
    %2162 = vmatpush1.msra.mxu0 %v2063
    %2163 = vmatprep.subr.mxu0 0.0
    %2164 = vmatpush1.msra.mxu0 %v2064
    %2165 = vmatprep.subr.mxu0 0.0
    %2166 = vmatpush1.msra.mxu0 %v2065
    %2167 = vmatprep.subr.mxu0 0.0
    %2168 = vmatpush1.msra.mxu0 %v2066
    %2169 = vmatprep.subr.mxu0 0.0
    %2170 = vmatpush1.msra.mxu0 %v2067
    %2171 = vmatprep.subr.mxu0 0.0
    %2172 = vmatpush1.msra.mxu0 %v2068
    %2173 = vmatprep.subr.mxu0 0.0
    %2174 = vmatpush1.msra.mxu0 %v2069
    %2175 = vmatprep.subr.mxu0 0.0
    %2176 = vmatpush1.msra.mxu0 %v2070
    %2177 = vmatprep.subr.mxu0 0.0
    %2178 = vmatpush1.msra.mxu0 %v2071
    %2179 = vmatprep.subr.mxu0 0.0
    %2180 = vmatpush1.msra.mxu0 %v2072
    %2181 = vmatprep.subr.mxu0 0.0
    %2182 = vmatpush1.msra.mxu0 %v2073
    %2183 = vmatprep.subr.mxu0 0.0
    %2184 = vmatpush1.msra.mxu0 0.0
    %2185 = vmatprep.subr.mxu0 0.0
    %2186 = vmatpush1.msra.mxu0 0.0
    %2187 = vmatprep.subr.mxu0 0.0
    %2188 = vmatpush1.msra.mxu0 0.0
    %2189 = vmatprep.subr.mxu0 0.0
    %2190 = vmatpush1.msra.mxu0 0.0
    %2191 = vmatprep.subr.mxu0 0.0
    %2192 = vmatpush1.msra.mxu0 0.0
    %2193 = vmatprep.subr.mxu0 0.0
    %2194 = vmatpush1.msra.mxu0 0.0
    %2195 = vmatprep.subr.mxu0 0.0
    %2196 = vmatpush1.msra.mxu0 0.0
    %2197 = vmatprep.subr.mxu0 0.0
    %2198 = vmatpush1.msra.mxu0 0.0
    %2199 = vmatprep.subr.mxu0 0.0
    %2200 = vmatpush1.msra.mxu0 0.0
    %2201 = vmatprep.subr.mxu0 0.0
    %2202 = vmatpush1.msra.mxu0 0.0
    %2203 = vmatprep.subr.mxu0 0.0
    %2204 = vmatpush1.msra.mxu0 0.0
    %2205 = vmatprep.subr.mxu0 0.0
    %2206 = vmatpush1.msra.mxu0 0.0
    %2207 = vmatprep.subr.mxu0 0.0
    %2208 = vmatpush1.msra.mxu0 0.0
    %2209 = vmatprep.subr.mxu0 0.0
    %2210 = vmatpush1.msra.mxu0 0.0
    %2211 = vmatprep.subr.mxu0 0.0
    %2212 = vmatpush1.msra.mxu0 0.0
    %2213 = vmatprep.subr.mxu0 0.0
    %2214 = vmatpush1.msra.mxu0 0.0
    %2215 = vmatprep.mubr.f32.mxu0 0.0
    %2216 = vmatmul.mubr.f32.gmra.mrb[0].mxu0 %v2024
    %v2217 = vpop.f32.mrb[0].mxu0
    %v2218 = vadd.f32 %v2148, %v2217
    %v2219 = vpop.f32.mrb[0].mxu0
    %2220 = vdwg.mxu0
    %2221 = vst [vmem:[#allocation11] sm:$0x3] %v2218
    // Predicated region
    $region66: #{sirna_encoder2_forward.1} parent=1 // pred_check
      _
    $region67: #{sirna_encoder2_forward.1} parent=1 // pred_check_branch
      %2223 = sbr.rel (0) target = $region69
    $region68: #{sirna_encoder2_forward.1} parent=1 // pred_region
      %s2225 = ssub.s32 32, 32
      %2226 = vsyncadd [#allocation4], %s2225
      %s2228 = sshll.u32 [#allocation11], 4
      %s2229 = int_to_ptr.vmem [resolvable:$true] %s2228
      %2231 = dma.vmem_to_hbm [thread:$0]  %s2229, 32, %s11, [#allocation4]
    $region69: #{sirna_encoder2_forward.1} parent=1 // pred_fallthru
      _
    // Predicated region
    $region70: #{sirna_encoder2_forward.1} parent=1 // pred_check
      _
    $region71: #{sirna_encoder2_forward.1} parent=1 // pred_check_branch
      %2233 = sbr.rel (0) target = $region73
    $region72: #{sirna_encoder2_forward.1} parent=1 // pred_region
      %2234 = dma.done [#allocation4], 32
    $region73: #{sirna_encoder2_forward.1} parent=1 // pred_fallthru
      _
    %2235 = vsyncpa [#allocation3], 1
    %2236 = vsyncpa [#allocation6], 1
    %2237 = vsyncpa [#allocation9], 1
    %2238 = vsyncpa [#allocation4], 1

</llo_original>
